<compile_context>
chip_gen: v6e
topology: v6e:2x2x1
jax: 0.10.0
libtpu: 0.0.40
codegen_flags: <defaults>
</compile_context>

<pallas_src>
import functools

import jax
import jax.numpy as jnp
from jax import lax
from jax.experimental import pallas as pl
from jax.experimental.pallas import tpu as pltpu

LANE = 128          # TPU lane width; all feature dims padded to this
NEG_INF = -1e30     # additive mask value (representable in bf16)


def _round_up(x, m):
    return ((x + m - 1) // m) * m


def _choose_dst_tile(n_pad):
    # Keep live (T, N_pad) f32 temporaries + double-buffered bf16 mask blocks
    # comfortably inside v7x's 64 MiB VMEM (and v5e's tighter scoped default).
    if n_pad % 256 == 0 and n_pad <= 4096:
        return 256
    return 128


# ----------------------------------------------------------------------------
# Kernel 1: node projection   xw_aug = x @ w_aug        (bf16 MXU, f32 accum)
#   w_aug[:, :H]  = GATConv lin weight
#   w_aug[:, H]   = W @ a_dst  (so xw_aug[:, H] is the per-node dst attention term)
#   w_aug[:, H+1:] = 0
# ----------------------------------------------------------------------------
def _proj_kernel(x_ref, w_ref, out_ref):
    x = x_ref[...].astype(jnp.bfloat16)
    out_ref[...] = jnp.dot(x, w_ref[...], preferred_element_type=jnp.float32)


def project(x, w_aug, *, tile):
    n_pad, f_pad = x.shape
    return pl.pallas_call(
        _proj_kernel,
        out_shape=jax.ShapeDtypeStruct((n_pad, LANE), jnp.float32),
        grid_spec=pltpu.PrefetchScalarGridSpec(
            num_scalar_prefetch=0,
            grid=(n_pad // tile,),
            in_specs=[pl.BlockSpec((tile, f_pad), lambda i: (i, 0)),
                      pl.BlockSpec((f_pad, LANE), lambda i: (0, 0))],
            out_specs=pl.BlockSpec((tile, LANE), lambda i: (i, 0)),
        ),
        compiler_params=pltpu.CompilerParams(
            dimension_semantics=("parallel",)),
    )(x, w_aug)


# ----------------------------------------------------------------------------
# Kernel 2: masked attention softmax + aggregation + folded BN + ReLU,
#           gridded over destination-row blocks (full src dim per block).
# ----------------------------------------------------------------------------
def _gat_attn_bn_relu_kernel(xw_all_ref, xw_dst_ref, mask_ref, a_src_ref,
                             scale_ref, shift_ref, out_ref, *, hidden):
    xw = xw_all_ref[...]                                      # [N_pad, 128] f32 (resident)

    # alpha_src[j] = a_src . (x_j W)  -> [1, N_pad] (src nodes on lanes, no transpose)
    alpha_src = lax.dot_general(a_src_ref[...], xw,
                                (((1,), (1,)), ((), ())),
                                preferred_element_type=jnp.float32)

    # alpha_dst for this dst block: column `hidden` of the augmented projection
    xw_blk = xw_dst_ref[...]                                  # [T, 128]
    dst_sel = lax.broadcasted_iota(jnp.int32, (1, LANE), 1) == hidden
    alpha_dst = jnp.sum(jnp.where(dst_sel, xw_blk, 0.0), axis=-1, keepdims=True)

    # attention logits + LeakyReLU(0.2) + additive adjacency mask (f32)
    e = alpha_dst + alpha_src                                 # [T, N_pad]
    e = jnp.maximum(e, 0.2 * e)
    e = e + mask_ref[...].astype(jnp.float32)

    # row softmax over source nodes (full src dim -> no online rescaling needed)
    e_max = jnp.max(e, axis=-1, keepdims=True)
    p = jnp.exp(e - e_max)
    inv = pl.reciprocal(jnp.sum(p, axis=-1, keepdims=True), approx=True)
    attn = (p * inv).astype(jnp.bfloat16)

    # aggregate messages (bf16 MXU, f32 accum); padded lanes zeroed by scale/shift
    agg = jnp.dot(attn, xw.astype(jnp.bfloat16),
                  preferred_element_type=jnp.float32)          # [T, 128]

    # folded BatchNorm1d(eval) + conv bias, then ReLU
    out_ref[...] = jnp.maximum(agg * scale_ref[...] + shift_ref[...], 0.0)


def gat_layer(x, layer_params, mask, *, hidden, tile):
    """GATConv(heads=1, self-loops baked into mask) + BatchNorm1d(eval) + ReLU."""
    w_aug, a_src, scale, shift = layer_params
    n_pad = x.shape[0]
    xw = project(x, w_aug, tile=tile)

    kernel = functools.partial(_gat_attn_bn_relu_kernel, hidden=hidden)
    return pl.pallas_call(
        kernel,
        out_shape=jax.ShapeDtypeStruct((n_pad, LANE), jnp.float32),
        grid_spec=pltpu.PrefetchScalarGridSpec(
            num_scalar_prefetch=0,
            grid=(n_pad // tile,),
            in_specs=[
                pl.BlockSpec((n_pad, LANE), lambda i: (0, 0)),   # xw: all src nodes (resident)
                pl.BlockSpec((tile, LANE), lambda i: (i, 0)),    # xw: this dst block
                pl.BlockSpec((tile, n_pad), lambda i: (i, 0)),   # bf16 additive mask block
                pl.BlockSpec((1, LANE), lambda i: (0, 0)),       # a_src
                pl.BlockSpec((1, LANE), lambda i: (0, 0)),       # folded BN scale
                pl.BlockSpec((1, LANE), lambda i: (0, 0)),       # folded BN shift (+bias)
            ],
            out_specs=pl.BlockSpec((tile, LANE), lambda i: (i, 0)),
        ),
        compiler_params=pltpu.CompilerParams(
            dimension_semantics=("parallel",),
            vmem_limit_bytes=40 * 1024 * 1024),
    )(xw, xw, mask, a_src, scale, shift)


# ----------------------------------------------------------------------------
# Kernel 3: final Linear + ReLU + log_softmax (padded classes masked out)
# ----------------------------------------------------------------------------
def _head_kernel(x_ref, w_ref, b_ref, logp_ref, feat_ref, *, num_classes):
    z = jnp.dot(x_ref[...].astype(jnp.bfloat16), w_ref[...],
                preferred_element_type=jnp.float32) + b_ref[...]
    z = jnp.maximum(z, 0.0)                                   # ReLU
    feat_ref[...] = z                                         # second return value
    col = lax.broadcasted_iota(jnp.int32, z.shape, 1)
    zm = jnp.where(col < num_classes, z, NEG_INF)             # mask padded class lanes
    m = jnp.max(zm, axis=-1, keepdims=True)
    lse = jnp.log(jnp.sum(jnp.exp(zm - m), axis=-1, keepdims=True))
    logp_ref[...] = zm - m - lse                              # log_softmax(dim=1)


def head_layer(x, w, b, *, num_classes, tile):
    n_pad = x.shape[0]
    kernel = functools.partial(_head_kernel, num_classes=num_classes)
    return pl.pallas_call(
        kernel,
        out_shape=(jax.ShapeDtypeStruct((n_pad, LANE), jnp.float32),
                   jax.ShapeDtypeStruct((n_pad, LANE), jnp.float32)),
        grid_spec=pltpu.PrefetchScalarGridSpec(
            num_scalar_prefetch=0,
            grid=(n_pad // tile,),
            in_specs=[pl.BlockSpec((tile, LANE), lambda i: (i, 0)),
                      pl.BlockSpec((LANE, LANE), lambda i: (0, 0)),
                      pl.BlockSpec((1, LANE), lambda i: (0, 0))],
            out_specs=[pl.BlockSpec((tile, LANE), lambda i: (i, 0)),
                       pl.BlockSpec((tile, LANE), lambda i: (i, 0))],
        ),
        compiler_params=pltpu.CompilerParams(
            dimension_semantics=("parallel",)),
    )(x, w, b)


# ----------------------------------------------------------------------------
# Parameter construction (deterministic, mirrors module __init__ shapes)
# ----------------------------------------------------------------------------
def glorot(key, shape):
    fan_in, fan_out = shape
    limit = jnp.sqrt(6.0 / (fan_in + fan_out))
    return jax.random.uniform(key, shape, jnp.float32, -limit, limit)


def make_gat_layer_params(key, f_in, hidden):
    """GATConv(heads=1) + BatchNorm1d(eval stats) packed into 4 lane-dense tensors."""
    assert f_in <= LANE and hidden < LANE
    k_w, k_as, k_ad = jax.random.split(key, 3)
    w = glorot(k_w, (f_in, hidden))                      # GATConv lin weight
    a_src = glorot(k_as, (1, hidden))                    # att_src (heads=1)
    a_dst = glorot(k_ad, (1, hidden))                    # att_dst (heads=1)
    bias = jnp.zeros((hidden,), jnp.float32)             # GATConv bias init = 0
    gamma = jnp.ones((hidden,), jnp.float32)             # BatchNorm1d defaults
    beta = jnp.zeros((hidden,), jnp.float32)
    mean = jnp.zeros((hidden,), jnp.float32)
    var = jnp.ones((hidden,), jnp.float32)

    # fold a_dst into an extra projection column (column `hidden` of w_aug)
    w_aug = jnp.zeros((LANE, LANE), jnp.float32)
    w_aug = w_aug.at[:f_in, :hidden].set(w)
    w_aug = w_aug.at[:f_in, hidden].set(w @ a_dst[0])
    w_aug = w_aug.astype(jnp.bfloat16)                   # MXU fast path

    a_src_pad = jnp.zeros((1, LANE), jnp.float32).at[0, :hidden].set(a_src[0])

    # fold BatchNorm(eval) + conv bias: y = agg * scale + shift (zero on padded lanes)
    s = gamma * lax.rsqrt(var + 1e-5)
    scale = jnp.zeros((1, LANE), jnp.float32).at[0, :hidden].set(s)
    shift = jnp.zeros((1, LANE), jnp.float32).at[0, :hidden].set(beta + (bias - mean) * s)
    return (w_aug, a_src_pad, scale, shift)


def gat_forward(x, mask, conv_params, head_w, head_b, *,
                n_nodes, hidden, num_classes, tile):
    for params in conv_params:
        x = gat_layer(x, params, mask, hidden=hidden, tile=tile)
        # F.dropout: identity in eval mode
    logp, feat = head_layer(x, head_w, head_b, num_classes=num_classes, tile=tile)
    # final F.dropout on feat: identity in eval mode
    return logp[:n_nodes, :num_classes], feat[:n_nodes, :num_classes]


# ----------------------------------------------------------------------------
if __name__ == "__main__":
    N, NUM_FEATURES, HIDDEN, NUM_CLASSES, N_LAYERS = 16, 8, 32, 4, 2

    N_PAD = _round_up(N, LANE)            # lane-dense src dim for the N x N mask
    TILE = _choose_dst_tile(N_PAD)

    key = jax.random.PRNGKey(0)
    k_x, k_edges, k_lin, *k_layers = jax.random.split(key, 4 + N_LAYERS)

    # node features (data.x)
    x = jax.random.normal(k_x, (N, NUM_FEATURES), jnp.float32)

    # edge_index -> dense adjacency adj[dst, src]; ring graph + random edges,
    # plus self-loops (GATConv add_self_loops=True default)
    src_ring = jnp.arange(N)
    dst_ring = (src_ring + 1) % N
    extra = jax.random.randint(k_edges, (2, 8), 0, N)
    adj = jnp.zeros((N, N), jnp.float32)
    adj = adj.at[dst_ring, src_ring].set(1.0)
    adj = adj.at[src_ring, dst_ring].set(1.0)
    adj = adj.at[extra[1], extra[0]].set(1.0)
    adj = adj.at[jnp.arange(N), jnp.arange(N)].set(1.0)

    # pad to lane-dense shapes; adjacency -> bf16 additive mask (0 keep / -1e30 drop)
    x_pad = jnp.zeros((N_PAD, LANE), jnp.float32).at[:N, :NUM_FEATURES].set(x)
    adj_pad = jnp.zeros((N_PAD, N_PAD), jnp.float32).at[:N, :N].set(adj)
    mask = jnp.where(adj_pad > 0, 0.0, NEG_INF).astype(jnp.bfloat16)

    # conv1: num_features -> hidden ; convs[i]: hidden -> hidden
    conv_params = [make_gat_layer_params(k_layers[0], NUM_FEATURES, HIDDEN)]
    for i in range(N_LAYERS - 1):
        conv_params.append(make_gat_layer_params(k_layers[1 + i], HIDDEN, HIDDEN))

    # lin1: hidden -> num_classes, zero-padded to a 128x128 bf16 MXU tile
    k_lw, k_lb = jax.random.split(k_lin)
    lim = 1.0 / jnp.sqrt(jnp.float32(HIDDEN))
    lin_w = jax.random.uniform(k_lw, (HIDDEN, NUM_CLASSES), jnp.float32, -lim, lim)
    lin_b = jax.random.uniform(k_lb, (NUM_CLASSES,), jnp.float32, -lim, lim)
    head_w = (jnp.zeros((LANE, LANE), jnp.float32)
              .at[:HIDDEN, :NUM_CLASSES].set(lin_w).astype(jnp.bfloat16))
    head_b = jnp.zeros((1, LANE), jnp.float32).at[0, :NUM_CLASSES].set(lin_b)

    fwd = jax.jit(functools.partial(gat_forward, n_nodes=N, hidden=HIDDEN,
                                    num_classes=NUM_CLASSES, tile=TILE))
    logp, feat = fwd(x_pad, mask, conv_params, head_w, head_b)
    jax.block_until_ready((logp, feat))

    assert logp.shape == (N, NUM_CLASSES) and feat.shape == (N, NUM_CLASSES)
    assert bool(jnp.all(jnp.isfinite(logp))) and bool(jnp.all(jnp.isfinite(feat)))
    # sanity: each row of log_softmax exponentiates to ~1
    assert jnp.allclose(jnp.sum(jnp.exp(logp), axis=1), 1.0, atol=1e-3)
    print("KERNEL_OK")
</pallas_src>

<mosaic_0001>
module attributes {stable_mosaic.version = 11 : i64} {
  func.func @_proj_kernel(%arg0: i32, %arg1: memref<128x128xf32, #tpu.memory_space<vmem>>, %arg2: memref<128x128xbf16, #tpu.memory_space<vmem>>, %arg3: memref<128x128xf32, #tpu.memory_space<vmem>>) attributes {dimension_semantics = [#tpu.dimension_semantics<parallel>], iteration_bounds = array<i64: 1>, scalar_prefetch = 0 : i64, scratch_operands = 0 : i64, tpu.core_type = #tpu.core_type<tc>, window_params = [{transform_indices = @transform_0, window_bounds = array<i64: 128, 128>}, {pipeline_mode = #tpu.pipeline_mode<synchronous>, transform_indices = @transform_1, window_bounds = array<i64: 128, 128>}, {transform_indices = @transform_2, window_bounds = array<i64: 128, 128>}]} {
    %c0 = arith.constant 0 : index
    %c0_0 = arith.constant 0 : index
    %0 = vector.load %arg1[%c0, %c0_0] : memref<128x128xf32, #tpu.memory_space<vmem>>, vector<128x128xf32>
    %1 = arith.truncf %0 : vector<128x128xf32> to vector<128x128xbf16>
    %c0_1 = arith.constant 0 : index
    %c0_2 = arith.constant 0 : index
    %2 = vector.load %arg2[%c0_1, %c0_2] : memref<128x128xbf16, #tpu.memory_space<vmem>>, vector<128x128xbf16>
    %cst = arith.constant dense<0.000000e+00> : vector<128x128xf32>
    %3 = tpu.matmul %1, %2, %cst {dimension_numbers = #tpu.dot_dimension_numbers<[1], [0], [0], [1], [0, 0, 1, 1], [], []>} : vector<128x128xbf16>, vector<128x128xbf16>, vector<128x128xf32> -> vector<128x128xf32>
    %c0_3 = arith.constant 0 : index
    %c0_4 = arith.constant 0 : index
    %4 = vector.load %arg3[%c0_3, %c0_4] : memref<128x128xf32, #tpu.memory_space<vmem>>, vector<128x128xf32>
    tpu.vector_store %arg3[%c0_3, %c0_4], %3 {strides = array<i32>} : memref<128x128xf32, #tpu.memory_space<vmem>>, vector<128x128xf32>,
    return
  }
  func.func @transform_0(%arg0: i32) -> (i32, i32) {
    %c0_i32 = arith.constant 0 : i32
    %c0_i32_0 = arith.constant 0 : i32
    return %arg0, %c0_i32 : i32, i32
  }
  func.func @transform_1(%arg0: i32) -> (i32, i32) {
    %c0_i32 = arith.constant 0 : i32
    %c0_i32_0 = arith.constant 0 : i32
    %c0_i32_1 = arith.constant 0 : i32
    return %c0_i32, %c0_i32_0 : i32, i32
  }
  func.func @transform_2(%arg0: i32) -> (i32, i32) {
    %c0_i32 = arith.constant 0 : i32
    %c0_i32_0 = arith.constant 0 : i32
    return %arg0, %c0_i32 : i32, i32
  }
}

module attributes {stable_mosaic.version = 11 : i64} {
  func.func @_proj_kernel(%arg0: i32, %arg1: memref<128x128xf32, #tpu.memory_space<vmem>>, %arg2: memref<128x128xbf16, #tpu.memory_space<vmem>>, %arg3: memref<128x128xf32, #tpu.memory_space<vmem>>) attributes {dimension_semantics = [#tpu.dimension_semantics<parallel>], iteration_bounds = array<i64: 1>, scalar_prefetch = 0 : i64, scratch_operands = 0 : i64, tpu.core_type = #tpu.core_type<tc>, window_params = [{transform_indices = @transform_0, window_bounds = array<i64: 128, 128>}, {pipeline_mode = #tpu.pipeline_mode<synchronous>, transform_indices = @transform_1, window_bounds = array<i64: 128, 128>}, {transform_indices = @transform_2, window_bounds = array<i64: 128, 128>}]} {
    %c0 = arith.constant 0 : index
    %c0_0 = arith.constant 0 : index
    %0 = vector.load %arg1[%c0, %c0_0] : memref<128x128xf32, #tpu.memory_space<vmem>>, vector<128x128xf32>
    %1 = arith.truncf %0 : vector<128x128xf32> to vector<128x128xbf16>
    %c0_1 = arith.constant 0 : index
    %c0_2 = arith.constant 0 : index
    %2 = vector.load %arg2[%c0_1, %c0_2] : memref<128x128xbf16, #tpu.memory_space<vmem>>, vector<128x128xbf16>
    %cst = arith.constant dense<0.000000e+00> : vector<128x128xf32>
    %3 = tpu.matmul %1, %2, %cst {dimension_numbers = #tpu.dot_dimension_numbers<[1], [0], [0], [1], [0, 0, 1, 1], [], []>} : vector<128x128xbf16>, vector<128x128xbf16>, vector<128x128xf32> -> vector<128x128xf32>
    %c0_3 = arith.constant 0 : index
    %c0_4 = arith.constant 0 : index
    %4 = vector.load %arg3[%c0_3, %c0_4] : memref<128x128xf32, #tpu.memory_space<vmem>>, vector<128x128xf32>
    tpu.vector_store %arg3[%c0_3, %c0_4], %3 {strides = array<i32>} : memref<128x128xf32, #tpu.memory_space<vmem>>, vector<128x128xf32>,
    return
  }
  func.func @transform_0(%arg0: i32) -> (i32, i32) {
    %c0_i32 = arith.constant 0 : i32
    %c0_i32_0 = arith.constant 0 : i32
    return %arg0, %c0_i32 : i32, i32
  }
  func.func @transform_1(%arg0: i32) -> (i32, i32) {
    %c0_i32 = arith.constant 0 : i32
    %c0_i32_0 = arith.constant 0 : i32
    %c0_i32_1 = arith.constant 0 : i32
    return %c0_i32, %c0_i32_0 : i32, i32
  }
  func.func @transform_2(%arg0: i32) -> (i32, i32) {
    %c0_i32 = arith.constant 0 : i32
    %c0_i32_0 = arith.constant 0 : i32
    return %arg0, %c0_i32 : i32, i32
  }
}

module attributes {stable_mosaic.version = 11 : i64} {
  func.func @_head_kernel(%arg0: i32, %arg1: memref<128x128xf32, #tpu.memory_space<vmem>>, %arg2: memref<128x128xbf16, #tpu.memory_space<vmem>>, %arg3: memref<1x128xf32, #tpu.memory_space<vmem>>, %arg4: memref<128x128xf32, #tpu.memory_space<vmem>>, %arg5: memref<128x128xf32, #tpu.memory_space<vmem>>) attributes {dimension_semantics = [#tpu.dimension_semantics<parallel>], iteration_bounds = array<i64: 1>, scalar_prefetch = 0 : i64, scratch_operands = 0 : i64, tpu.core_type = #tpu.core_type<tc>, window_params = [{transform_indices = @transform_0, window_bounds = array<i64: 128, 128>}, {pipeline_mode = #tpu.pipeline_mode<synchronous>, transform_indices = @transform_1, window_bounds = array<i64: 128, 128>}, {pipeline_mode = #tpu.pipeline_mode<synchronous>, transform_indices = @transform_2, window_bounds = array<i64: 1, 128>}, {transform_indices = @transform_3, window_bounds = array<i64: 128, 128>}, {transform_indices = @transform_4, window_bounds = array<i64: 128, 128>}]} {
    %c0 = arith.constant 0 : index
    %c0_0 = arith.constant 0 : index
    %0 = vector.load %arg1[%c0, %c0_0] : memref<128x128xf32, #tpu.memory_space<vmem>>, vector<128x128xf32>
    %1 = arith.truncf %0 : vector<128x128xf32> to vector<128x128xbf16>
    %c0_1 = arith.constant 0 : index
    %c0_2 = arith.constant 0 : index
    %2 = vector.load %arg2[%c0_1, %c0_2] : memref<128x128xbf16, #tpu.memory_space<vmem>>, vector<128x128xbf16>
    %cst = arith.constant dense<0.000000e+00> : vector<128x128xf32>
    %3 = tpu.matmul %1, %2, %cst {dimension_numbers = #tpu.dot_dimension_numbers<[1], [0], [0], [1], [0, 0, 1, 1], [], []>} : vector<128x128xbf16>, vector<128x128xbf16>, vector<128x128xf32> -> vector<128x128xf32>
    %c0_3 = arith.constant 0 : index
    %c0_4 = arith.constant 0 : index
    %4 = vector.load %arg3[%c0_3, %c0_4] : memref<1x128xf32, #tpu.memory_space<vmem>>, vector<1x128xf32>
    %5 = vector.broadcast %4 : vector<1x128xf32> to vector<128x128xf32>
    %6 = arith.addf %3, %5 : vector<128x128xf32>
    %cst_5 = arith.constant 0.000000e+00 : f32
    %7 = vector.broadcast %cst_5 : f32 to vector<128x128xf32>
    %8 = arith.maximumf %6, %7 : vector<128x128xf32>
    %c0_6 = arith.constant 0 : index
    %c0_7 = arith.constant 0 : index
    %9 = vector.load %arg5[%c0_6, %c0_7] : memref<128x128xf32, #tpu.memory_space<vmem>>, vector<128x128xf32>
    tpu.vector_store %arg5[%c0_6, %c0_7], %8 {strides = array<i32>} : memref<128x128xf32, #tpu.memory_space<vmem>>, vector<128x128xf32>,
    %10 = tpu.iota {dimensions = array<i32: 1>} : vector<128x128xi32>
    %c4_i32 = arith.constant 4 : i32
    %11 = vector.broadcast %c4_i32 : i32 to vector<128x128xi32>
    %12 = arith.cmpi slt, %10, %11 : vector<128x128xi32>
    %cst_8 = arith.constant -1.000000e+30 : f32
    %13 = vector.broadcast %cst_8 : f32 to vector<128x128xf32>
    %14 = arith.select %12, %8, %13 : vector<128x128xi1>, vector<128x128xf32>
    %cst_9 = arith.constant dense<0xFF800000> : vector<128xf32>
    %15 = vector.multi_reduction <maximumf>, %14, %cst_9 [1] : vector<128x128xf32> to vector<128xf32>
    %16 = vector.shape_cast %15 : vector<128xf32> to vector<128x1xf32>
    %17 = vector.broadcast %16 : vector<128x1xf32> to vector<128x128xf32>
    %18 = arith.subf %14, %17 : vector<128x128xf32>
    %19 = math.exp %18 : vector<128x128xf32>
    %cst_10 = arith.constant dense<0.000000e+00> : vector<128xf32>
    %20 = vector.multi_reduction <add>, %19, %cst_10 [1] : vector<128x128xf32> to vector<128xf32>
    %21 = vector.shape_cast %20 : vector<128xf32> to vector<128x1xf32>
    %22 = math.log %21 : vector<128x1xf32>
    %23 = vector.broadcast %16 : vector<128x1xf32> to vector<128x128xf32>
    %24 = arith.subf %14, %23 : vector<128x128xf32>
    %25 = vector.broadcast %22 : vector<128x1xf32> to vector<128x128xf32>
    %26 = arith.subf %24, %25 : vector<128x128xf32>
    %c0_11 = arith.constant 0 : index
    %c0_12 = arith.constant 0 : index
    %27 = vector.load %arg4[%c0_11, %c0_12] : memref<128x128xf32, #tpu.memory_space<vmem>>, vector<128x128xf32>
    tpu.vector_store %arg4[%c0_11, %c0_12], %26 {strides = array<i32>} : memref<128x128xf32, #tpu.memory_space<vmem>>, vector<128x128xf32>,
    return
  }
  func.func @transform_0(%arg0: i32) -> (i32, i32) {
    %c0_i32 = arith.constant 0 : i32
    %c0_i32_0 = arith.constant 0 : i32
    return %arg0, %c0_i32 : i32, i32
  }
  func.func @transform_1(%arg0: i32) -> (i32, i32) {
    %c0_i32 = arith.constant 0 : i32
    %c0_i32_0 = arith.constant 0 : i32
    %c0_i32_1 = arith.constant 0 : i32
    return %c0_i32, %c0_i32_0 : i32, i32
  }
  func.func @transform_2(%arg0: i32) -> (i32, i32) {
    %c0_i32 = arith.constant 0 : i32
    %c0_i32_0 = arith.constant 0 : i32
    %c0_i32_1 = arith.constant 0 : i32
    return %c0_i32, %c0_i32_0 : i32, i32
  }
  func.func @transform_3(%arg0: i32) -> (i32, i32) {
    %c0_i32 = arith.constant 0 : i32
    %c0_i32_0 = arith.constant 0 : i32
    return %arg0, %c0_i32 : i32, i32
  }
  func.func @transform_4(%arg0: i32) -> (i32, i32) {
    %c0_i32 = arith.constant 0 : i32
    %c0_i32_0 = arith.constant 0 : i32
    return %arg0, %c0_i32 : i32, i32
  }
}

module attributes {stable_mosaic.version = 11 : i64} {
  func.func @_gat_attn_bn_relu_kernel(%arg0: i32, %arg1: memref<128x128xf32, #tpu.memory_space<vmem>>, %arg2: memref<128x128xf32, #tpu.memory_space<vmem>>, %arg3: memref<128x128xbf16, #tpu.memory_space<vmem>>, %arg4: memref<1x128xf32, #tpu.memory_space<vmem>>, %arg5: memref<1x128xf32, #tpu.memory_space<vmem>>, %arg6: memref<1x128xf32, #tpu.memory_space<vmem>>, %arg7: memref<128x128xf32, #tpu.memory_space<vmem>>) attributes {dimension_semantics = [#tpu.dimension_semantics<parallel>], iteration_bounds = array<i64: 1>, scalar_prefetch = 0 : i64, scratch_operands = 0 : i64, tpu.core_type = #tpu.core_type<tc>, window_params = [{pipeline_mode = #tpu.pipeline_mode<synchronous>, transform_indices = @transform_0, window_bounds = array<i64: 128, 128>}, {transform_indices = @transform_1, window_bounds = array<i64: 128, 128>}, {transform_indices = @transform_2, window_bounds = array<i64: 128, 128>}, {pipeline_mode = #tpu.pipeline_mode<synchronous>, transform_indices = @transform_3, window_bounds = array<i64: 1, 128>}, {pipeline_mode = #tpu.pipeline_mode<synchronous>, transform_indices = @transform_4, window_bounds = array<i64: 1, 128>}, {pipeline_mode = #tpu.pipeline_mode<synchronous>, transform_indices = @transform_5, window_bounds = array<i64: 1, 128>}, {transform_indices = @transform_6, window_bounds = array<i64: 128, 128>}]} {
    %c0 = arith.constant 0 : index
    %c0_0 = arith.constant 0 : index
    %0 = vector.load %arg1[%c0, %c0_0] : memref<128x128xf32, #tpu.memory_space<vmem>>, vector<128x128xf32>
    %c0_1 = arith.constant 0 : index
    %c0_2 = arith.constant 0 : index
    %1 = vector.load %arg4[%c0_1, %c0_2] : memref<1x128xf32, #tpu.memory_space<vmem>>, vector<1x128xf32>
    %cst = arith.constant dense<0.000000e+00> : vector<1x128xf32>
    %2 = tpu.matmul %1, %0, %cst {dimension_numbers = #tpu.dot_dimension_numbers<[1], [1], [0], [0], [0, 0, 1, 0], [], []>} : vector<1x128xf32>, vector<128x128xf32>, vector<1x128xf32> -> vector<1x128xf32>
    %c0_3 = arith.constant 0 : index
    %c0_4 = arith.constant 0 : index
    %3 = vector.load %arg2[%c0_3, %c0_4] : memref<128x128xf32, #tpu.memory_space<vmem>>, vector<128x128xf32>
    %4 = tpu.iota {dimensions = array<i32: 1>} : vector<1x128xi32>
    %c32_i32 = arith.constant 32 : i32
    %5 = vector.broadcast %c32_i32 : i32 to vector<1x128xi32>
    %6 = arith.cmpi eq, %4, %5 : vector<1x128xi32>
    %cst_5 = arith.constant 0.000000e+00 : f32
    %7 = vector.shape_cast %6 : vector<1x128xi1> to vector<1x128xi1>
    %8 = vector.broadcast %7 : vector<1x128xi1> to vector<128x128xi1>
    %9 = vector.broadcast %cst_5 : f32 to vector<128x128xf32>
    %10 = arith.select %8, %3, %9 : vector<128x128xi1>, vector<128x128xf32>
    %cst_6 = arith.constant dense<0.000000e+00> : vector<128xf32>
    %11 = vector.multi_reduction <add>, %10, %cst_6 [1] : vector<128x128xf32> to vector<128xf32>
    %12 = vector.shape_cast %11 : vector<128xf32> to vector<128x1xf32>
    %13 = vector.broadcast %12 : vector<128x1xf32> to vector<128x128xf32>
    %14 = vector.broadcast %2 : vector<1x128xf32> to vector<128x128xf32>
    %15 = arith.addf %13, %14 : vector<128x128xf32>
    %cst_7 = arith.constant 2.000000e-01 : f32
    %16 = vector.broadcast %cst_7 : f32 to vector<128x128xf32>
    %17 = arith.mulf %16, %15 : vector<128x128xf32>
    %18 = arith.maximumf %15, %17 : vector<128x128xf32>
    %c0_8 = arith.constant 0 : index
    %c0_9 = arith.constant 0 : index
    %19 = vector.load %arg3[%c0_8, %c0_9] : memref<128x128xbf16, #tpu.memory_space<vmem>>, vector<128x128xbf16>
    %20 = arith.extf %19 : vector<128x128xbf16> to vector<128x128xf32>
    %21 = arith.addf %18, %20 : vector<128x128xf32>
    %cst_10 = arith.constant dense<0xFF800000> : vector<128xf32>
    %22 = vector.multi_reduction <maximumf>, %21, %cst_10 [1] : vector<128x128xf32> to vector<128xf32>
    %23 = vector.shape_cast %22 : vector<128xf32> to vector<128x1xf32>
    %24 = vector.broadcast %23 : vector<128x1xf32> to vector<128x128xf32>
    %25 = arith.subf %21, %24 : vector<128x128xf32>
    %26 = math.exp %25 : vector<128x128xf32>
    %cst_11 = arith.constant dense<0.000000e+00> : vector<128xf32>
    %27 = vector.multi_reduction <add>, %26, %cst_11 [1] : vector<128x128xf32> to vector<128xf32>
    %28 = vector.shape_cast %27 : vector<128xf32> to vector<128x1xf32>
    %29 = tpu.reciprocal %28 {approx = true} : vector<128x1xf32> -> vector<128x1xf32>
    %30 = vector.broadcast %29 : vector<128x1xf32> to vector<128x128xf32>
    %31 = arith.mulf %26, %30 : vector<128x128xf32>
    %32 = arith.truncf %31 : vector<128x128xf32> to vector<128x128xbf16>
    %33 = arith.truncf %0 : vector<128x128xf32> to vector<128x128xbf16>
    %cst_12 = arith.constant dense<0.000000e+00> : vector<128x128xf32>
    %34 = tpu.matmul %32, %33, %cst_12 {dimension_numbers = #tpu.dot_dimension_numbers<[1], [0], [0], [1], [0, 0, 1, 1], [], []>} : vector<128x128xbf16>, vector<128x128xbf16>, vector<128x128xf32> -> vector<128x128xf32>
    %c0_13 = arith.constant 0 : index
    %c0_14 = arith.constant 0 : index
    %35 = vector.load %arg5[%c0_13, %c0_14] : memref<1x128xf32, #tpu.memory_space<vmem>>, vector<1x128xf32>
    %36 = vector.broadcast %35 : vector<1x128xf32> to vector<128x128xf32>
    %37 = arith.mulf %34, %36 : vector<128x128xf32>
    %c0_15 = arith.constant 0 : index
    %c0_16 = arith.constant 0 : index
    %38 = vector.load %arg6[%c0_15, %c0_16] : memref<1x128xf32, #tpu.memory_space<vmem>>, vector<1x128xf32>
    %39 = vector.broadcast %38 : vector<1x128xf32> to vector<128x128xf32>
    %40 = arith.addf %37, %39 : vector<128x128xf32>
    %cst_17 = arith.constant 0.000000e+00 : f32
    %41 = vector.broadcast %cst_17 : f32 to vector<128x128xf32>
    %42 = arith.maximumf %40, %41 : vector<128x128xf32>
    %c0_18 = arith.constant 0 : index
    %c0_19 = arith.constant 0 : index
    %43 = vector.load %arg7[%c0_18, %c0_19] : memref<128x128xf32, #tpu.memory_space<vmem>>, vector<128x128xf32>
    tpu.vector_store %arg7[%c0_18, %c0_19], %42 {strides = array<i32>} : memref<128x128xf32, #tpu.memory_space<vmem>>, vector<128x128xf32>,
    return
  }
  func.func @transform_0(%arg0: i32) -> (i32, i32) {
    %c0_i32 = arith.constant 0 : i32
    %c0_i32_0 = arith.constant 0 : i32
    %c0_i32_1 = arith.constant 0 : i32
    return %c0_i32, %c0_i32_0 : i32, i32
  }
  func.func @transform_1(%arg0: i32) -> (i32, i32) {
    %c0_i32 = arith.constant 0 : i32
    %c0_i32_0 = arith.constant 0 : i32
    return %arg0, %c0_i32 : i32, i32
  }
  func.func @transform_2(%arg0: i32) -> (i32, i32) {
    %c0_i32 = arith.constant 0 : i32
    %c0_i32_0 = arith.constant 0 : i32
    return %arg0, %c0_i32 : i32, i32
  }
  func.func @transform_3(%arg0: i32) -> (i32, i32) {
    %c0_i32 = arith.constant 0 : i32
    %c0_i32_0 = arith.constant 0 : i32
    %c0_i32_1 = arith.constant 0 : i32
    return %c0_i32, %c0_i32_0 : i32, i32
  }
  func.func @transform_4(%arg0: i32) -> (i32, i32) {
    %c0_i32 = arith.constant 0 : i32
    %c0_i32_0 = arith.constant 0 : i32
    %c0_i32_1 = arith.constant 0 : i32
    return %c0_i32, %c0_i32_0 : i32, i32
  }
  func.func @transform_5(%arg0: i32) -> (i32, i32) {
    %c0_i32 = arith.constant 0 : i32
    %c0_i32_0 = arith.constant 0 : i32
    %c0_i32_1 = arith.constant 0 : i32
    return %c0_i32, %c0_i32_0 : i32, i32
  }
  func.func @transform_6(%arg0: i32) -> (i32, i32) {
    %c0_i32 = arith.constant 0 : i32
    %c0_i32_0 = arith.constant 0 : i32
    return %arg0, %c0_i32 : i32, i32
  }
}

</mosaic_0001>

<llo_original>
// kernel: gat_forward.9
$region0: #{gat_forward.9}
  #allocation0 [shape = 'u32[]', space=smem, size = 0x4, offset = 0x4, fixed_abs, tag = 'smem constant byte address 0x4 - core index']
  #allocation1 [shape = 'u32[144,128]{1,0:T(1,128)}', space=vmem, size = 0x12000, scoped, tag = 'internal scratch']
  %s0 = inlined_call_operand.vmem [shape: f32[128,128], index: 0, kind: input, shape index: {}]
  %s1 = inlined_call_operand.vmem [shape: bf16[128,128], index: 1, kind: input, shape index: {}]
  %s2 = inlined_call_operand.vmem [shape: f32[1,128], index: 2, kind: input, shape index: {}]
  %s3 = inlined_call_operand.vmem [shape: f32[128,128], index: 3, kind: output, shape index: {0}]
  %s4 = inlined_call_operand.vmem [shape: f32[128,128], index: 4, kind: output, shape index: {1}]
  %5 = xla_tuple %s3, %s4
  %s6 = sld [smem:[#allocation0]]
  $region30: #{gat_forward.9} parent=0
    _
  %s8 = ssub.s32 1, %s6
  %s9 = scalar_select 0, %s8, %s6
  // Predicated region
  $region2: #{gat_forward.9} parent=0 // pred_check
    _
  $region3: #{gat_forward.9} parent=0 // pred_check_branch
    %11 = sbr.rel (0) target = $region5
  $region4: #{gat_forward.9} parent=0 // pred_region
    _
  $region5: #{gat_forward.9} parent=0 // pred_fallthru
    _
  // Predicated region
  $region6: #{gat_forward.9} parent=0 // pred_check
    _
  $region7: #{gat_forward.9} parent=0 // pred_check_branch
    %13 = sbr.rel (0) target = $region9
  $region8: #{gat_forward.9} parent=0 // pred_region
    _
  $region9: #{gat_forward.9} parent=0 // pred_fallthru
    _
  // Predicated region
  $region10: #{gat_forward.9} parent=0 // pred_check
    _
  $region11: #{gat_forward.9} parent=0 // pred_check_branch
    %15 = sbr.rel (0) target = $region13
  $region12: #{gat_forward.9} parent=0 // pred_region
    _
  $region13: #{gat_forward.9} parent=0 // pred_fallthru
    _
  %v17 = vld [vmem:[%s0] sm:$0xff]
  %v18 = vld [vmem:[%s0 + $0x8] sm:$0xff]
  %v19 = vld [vmem:[%s0 + $0x10] sm:$0xff]
  %v20 = vld [vmem:[%s0 + $0x18] sm:$0xff]
  %v21 = vld [vmem:[%s0 + $0x20] sm:$0xff]
  %v22 = vld [vmem:[%s0 + $0x28] sm:$0xff]
  %v23 = vld [vmem:[%s0 + $0x30] sm:$0xff]
  %v24 = vld [vmem:[%s0 + $0x38] sm:$0xff]
  %v25 = vld [vmem:[%s0 + $0x40] sm:$0xff]
  %v26 = vld [vmem:[%s0 + $0x48] sm:$0xff]
  %v27 = vld [vmem:[%s0 + $0x50] sm:$0xff]
  %v28 = vld [vmem:[%s0 + $0x58] sm:$0xff]
  %v29 = vld [vmem:[%s0 + $0x60] sm:$0xff]
  %v30 = vld [vmem:[%s0 + $0x68] sm:$0xff]
  %v31 = vld [vmem:[%s0 + $0x70] sm:$0xff]
  %v32 = vld [vmem:[%s0 + $0x78] sm:$0xff]
  %v33 = vpack.c.bf16 %v18, %v17
  %v34 = vpack.c.bf16 %v20, %v19
  %v35 = vpack.c.bf16 %v22, %v21
  %v36 = vpack.c.bf16 %v24, %v23
  %v37 = vpack.c.bf16 %v26, %v25
  %v38 = vpack.c.bf16 %v28, %v27
  %v39 = vpack.c.bf16 %v30, %v29
  %v40 = vpack.c.bf16 %v32, %v31
  %v41 = vld [vmem:[%s1] sm:$0xf]
  %v42 = vld [vmem:[%s1 + $0x4] sm:$0xf]
  %v43 = vld [vmem:[%s1 + $0x8] sm:$0xf]
  %v44 = vld [vmem:[%s1 + $0xc] sm:$0xf]
  %v45 = vld [vmem:[%s1 + $0x10] sm:$0xf]
  %v46 = vld [vmem:[%s1 + $0x14] sm:$0xf]
  %v47 = vld [vmem:[%s1 + $0x18] sm:$0xf]
  %v48 = vld [vmem:[%s1 + $0x1c] sm:$0xf]
  %v49 = vld [vmem:[%s1 + $0x20] sm:$0xf]
  %v50 = vld [vmem:[%s1 + $0x24] sm:$0xf]
  %v51 = vld [vmem:[%s1 + $0x28] sm:$0xf]
  %v52 = vld [vmem:[%s1 + $0x2c] sm:$0xf]
  %v53 = vld [vmem:[%s1 + $0x30] sm:$0xf]
  %v54 = vld [vmem:[%s1 + $0x34] sm:$0xf]
  %v55 = vld [vmem:[%s1 + $0x38] sm:$0xf]
  %v56 = vld [vmem:[%s1 + $0x3c] sm:$0xf]
  %v57 = vld [vmem:[%s2] sm:$0x1]
  %v59 = vlaneseq
  %v60 = vshrl.u32 %v59, 7
  %v61 = vsub.s32 0, %v60
  %v62 = vrot.slane %v57, %v61
  %v80 = vunpack.c.l.b16 %v41
  %v81 = vunpack.c.l.b16 %v42
  %v82 = vunpack.c.l.b16 %v43
  %v83 = vunpack.c.l.b16 %v44
  %v84 = vunpack.c.l.b16 %v45
  %v85 = vunpack.c.l.b16 %v46
  %v86 = vunpack.c.l.b16 %v47
  %v87 = vunpack.c.l.b16 %v48
  %v88 = vunpack.c.l.b16 %v49
  %v89 = vunpack.c.l.b16 %v50
  %v90 = vunpack.c.l.b16 %v51
  %v91 = vunpack.c.l.b16 %v52
  %v92 = vunpack.c.l.b16 %v53
  %v93 = vunpack.c.l.b16 %v54
  %v94 = vunpack.c.l.b16 %v55
  %v95 = vunpack.c.l.b16 %v56
  %v96 = vpack.c.b16 %v81, %v80
  %v97 = vpack.c.b16 %v83, %v82
  %v98 = vpack.c.b16 %v85, %v84
  %v99 = vpack.c.b16 %v87, %v86
  %v100 = vpack.c.b16 %v89, %v88
  %v101 = vpack.c.b16 %v91, %v90
  %v102 = vpack.c.b16 %v93, %v92
  %v103 = vpack.c.b16 %v95, %v94
  %112 = vmatprep.subr.bf16.mxu0 0
  %113 = vmatpush1.bf16.msra.mxu0 %v103
  %114 = vmatprep.subr.bf16.mxu0 0
  %115 = vmatpush1.bf16.msra.mxu0 %v102
  %116 = vmatprep.subr.bf16.mxu0 0
  %117 = vmatpush1.bf16.msra.mxu0 %v101
  %118 = vmatprep.subr.bf16.mxu0 0
  %119 = vmatpush1.bf16.msra.mxu0 %v100
  %120 = vmatprep.subr.bf16.mxu0 0
  %121 = vmatpush1.bf16.msra.mxu0 %v99
  %122 = vmatprep.subr.bf16.mxu0 0
  %123 = vmatpush1.bf16.msra.mxu0 %v98
  %124 = vmatprep.subr.bf16.mxu0 0
  %125 = vmatpush1.bf16.msra.mxu0 %v97
  %126 = vmatprep.subr.bf16.mxu0 0
  %127 = vmatpush1.bf16.msra.mxu0 %v96
  %128 = vmatprep.subr.bf16.mxu0 0
  %129 = vmatpush2.bf16.msra.mxu0 0
  %130 = vmatprep.subr.bf16.mxu0 0
  %131 = vmatpush2.bf16.msra.mxu0 0
  %132 = vmatprep.subr.bf16.mxu0 0
  %133 = vmatpush2.bf16.msra.mxu0 0
  %134 = vmatprep.subr.bf16.mxu0 0
  %135 = vmatpush2.bf16.msra.mxu0 0
  %136 = vmatprep.subr.bf16.mxu0 0
  %137 = vmatpush2.bf16.msra.mxu0 0
  %138 = vmatprep.subr.bf16.mxu0 0
  %139 = vmatpush2.bf16.msra.mxu0 0
  %140 = vmatprep.subr.bf16.mxu0 0
  %141 = vmatpush2.bf16.msra.mxu0 0
  %142 = vmatprep.subr.bf16.mxu0 0
  %143 = vmatpush2.bf16.msra.mxu0 0
  %144 = vmatprep.mubr.bf16.mxu0 0
  %145 = vmatmul.mubr.bf16.gmra.mxu0 %v33
  %v146 = vpop.f32.mrf.mxu0
  %v147 = vadd.f32 %v62, %v146
  %v148 = vpop.f32.mrf.mxu0
  %v149 = vpop.f32.mrf.mxu0
  %v150 = vadd.f32 %v62, %v149
  %v151 = vpop.f32.mrf.mxu0
  %152 = vmatprep.mubr.bf16.mxu0 0
  %153 = vmatmul.mubr.bf16.gmra.mxu0 %v34
  %v154 = vpop.f32.mrf.mxu0
  %v155 = vadd.f32 %v62, %v154
  %v156 = vpop.f32.mrf.mxu0
  %v157 = vpop.f32.mrf.mxu0
  %v158 = vadd.f32 %v62, %v157
  %v159 = vpop.f32.mrf.mxu0
  %160 = vmatprep.mubr.bf16.mxu0 0
  %161 = vmatmul.mubr.bf16.gmra.mxu0 %v35
  %v162 = vpop.f32.mrf.mxu0
  %v163 = vadd.f32 %v62, %v162
  %v164 = vpop.f32.mrf.mxu0
  %v165 = vpop.f32.mrf.mxu0
  %v166 = vadd.f32 %v62, %v165
  %v167 = vpop.f32.mrf.mxu0
  %168 = vmatprep.mubr.bf16.mxu0 0
  %169 = vmatmul.mubr.bf16.gmra.mxu0 %v36
  %v170 = vpop.f32.mrf.mxu0
  %v171 = vadd.f32 %v62, %v170
  %v172 = vpop.f32.mrf.mxu0
  %v173 = vpop.f32.mrf.mxu0
  %v174 = vadd.f32 %v62, %v173
  %v175 = vpop.f32.mrf.mxu0
  %176 = vmatprep.mubr.bf16.mxu0 0
  %177 = vmatmul.mubr.bf16.gmra.mxu0 %v37
  %v178 = vpop.f32.mrf.mxu0
  %v179 = vadd.f32 %v62, %v178
  %v180 = vpop.f32.mrf.mxu0
  %v181 = vpop.f32.mrf.mxu0
  %v182 = vadd.f32 %v62, %v181
  %v183 = vpop.f32.mrf.mxu0
  %184 = vmatprep.mubr.bf16.mxu0 0
  %185 = vmatmul.mubr.bf16.gmra.mxu0 %v38
  %v186 = vpop.f32.mrf.mxu0
  %v187 = vadd.f32 %v62, %v186
  %v188 = vpop.f32.mrf.mxu0
  %v189 = vpop.f32.mrf.mxu0
  %v190 = vadd.f32 %v62, %v189
  %v191 = vpop.f32.mrf.mxu0
  %192 = vmatprep.mubr.bf16.mxu0 0
  %193 = vmatmul.mubr.bf16.gmra.mxu0 %v39
  %v194 = vpop.f32.mrf.mxu0
  %v195 = vadd.f32 %v62, %v194
  %v196 = vpop.f32.mrf.mxu0
  %v197 = vpop.f32.mrf.mxu0
  %v198 = vadd.f32 %v62, %v197
  %v199 = vpop.f32.mrf.mxu0
  %200 = vmatprep.mubr.bf16.mxu0 0
  %201 = vmatmul.mubr.bf16.gmra.mxu0 %v40
  %v202 = vpop.f32.mrf.mxu0
  %v203 = vadd.f32 %v62, %v202
  %v204 = vpop.f32.mrf.mxu0
  %v205 = vpop.f32.mrf.mxu0
  %v206 = vadd.f32 %v62, %v205
  %v207 = vpop.f32.mrf.mxu0
  %208 = vdwg.mxu0
  %v209 = vmax.f32 %v147, 0.0
  %v210 = vmax.f32 %v150, 0.0
  %v211 = vmax.f32 %v155, 0.0
  %v212 = vmax.f32 %v158, 0.0
  %v213 = vmax.f32 %v163, 0.0
  %v214 = vmax.f32 %v166, 0.0
  %v215 = vmax.f32 %v171, 0.0
  %v216 = vmax.f32 %v174, 0.0
  %v217 = vmax.f32 %v179, 0.0
  %v218 = vmax.f32 %v182, 0.0
  %v219 = vmax.f32 %v187, 0.0
  %v220 = vmax.f32 %v190, 0.0
  %v221 = vmax.f32 %v195, 0.0
  %v222 = vmax.f32 %v198, 0.0
  %v223 = vmax.f32 %v203, 0.0
  %v224 = vmax.f32 %v206, 0.0
  %225 = vst [vmem:[%s4] sm:$0xff] %v209
  %226 = vst [vmem:[%s4 + $0x8] sm:$0xff] %v210
  %227 = vst [vmem:[%s4 + $0x10] sm:$0xff] %v211
  %228 = vst [vmem:[%s4 + $0x18] sm:$0xff] %v212
  %229 = vst [vmem:[%s4 + $0x20] sm:$0xff] %v213
  %230 = vst [vmem:[%s4 + $0x28] sm:$0xff] %v214
  %231 = vst [vmem:[%s4 + $0x30] sm:$0xff] %v215
  %232 = vst [vmem:[%s4 + $0x38] sm:$0xff] %v216
  %233 = vst [vmem:[%s4 + $0x40] sm:$0xff] %v217
  %234 = vst [vmem:[%s4 + $0x48] sm:$0xff] %v218
  %235 = vst [vmem:[%s4 + $0x50] sm:$0xff] %v219
  %236 = vst [vmem:[%s4 + $0x58] sm:$0xff] %v220
  %237 = vst [vmem:[%s4 + $0x60] sm:$0xff] %v221
  %238 = vst [vmem:[%s4 + $0x68] sm:$0xff] %v222
  %239 = vst [vmem:[%s4 + $0x70] sm:$0xff] %v223
  %240 = vst [vmem:[%s4 + $0x78] sm:$0xff] %v224
  %v241 = vlaneseq
  %v242 = vand.u32 %v241, 127
  %vm243 = vcmp.lt.s32.totalorder %v242, 4
  %v244 = vsel %vm243, %v209, -1e+30
  %v245 = vsel %vm243, %v210, -1e+30
  %v246 = vsel %vm243, %v211, -1e+30
  %v247 = vsel %vm243, %v212, -1e+30
  %v248 = vsel %vm243, %v213, -1e+30
  %v249 = vsel %vm243, %v214, -1e+30
  %v250 = vsel %vm243, %v215, -1e+30
  %v251 = vsel %vm243, %v216, -1e+30
  %v252 = vsel %vm243, %v217, -1e+30
  %v253 = vsel %vm243, %v218, -1e+30
  %v254 = vsel %vm243, %v219, -1e+30
  %v255 = vsel %vm243, %v220, -1e+30
  %v256 = vsel %vm243, %v221, -1e+30
  %v257 = vsel %vm243, %v222, -1e+30
  %v258 = vsel %vm243, %v223, -1e+30
  %v259 = vsel %vm243, %v224, -1e+30
  %260 = vmax.xlane.f32.xlu0 %v244
  %v261 = vpop.xlane.xlu0 %260
  %262 = vmax.xlane.f32.xlu0 %v245
  %v263 = vpop.xlane.xlu0 %262
  %264 = vmax.xlane.f32.xlu0 %v246
  %v265 = vpop.xlane.xlu0 %264
  %266 = vmax.xlane.f32.xlu0 %v247
  %v267 = vpop.xlane.xlu0 %266
  %268 = vmax.xlane.f32.xlu0 %v248
  %v269 = vpop.xlane.xlu0 %268
  %270 = vmax.xlane.f32.xlu0 %v249
  %v271 = vpop.xlane.xlu0 %270
  %272 = vmax.xlane.f32.xlu0 %v250
  %v273 = vpop.xlane.xlu0 %272
  %274 = vmax.xlane.f32.xlu0 %v251
  %v275 = vpop.xlane.xlu0 %274
  %276 = vmax.xlane.f32.xlu0 %v252
  %v277 = vpop.xlane.xlu0 %276
  %278 = vmax.xlane.f32.xlu0 %v253
  %v279 = vpop.xlane.xlu0 %278
  %280 = vmax.xlane.f32.xlu0 %v254
  %v281 = vpop.xlane.xlu0 %280
  %282 = vmax.xlane.f32.xlu0 %v255
  %v283 = vpop.xlane.xlu0 %282
  %284 = vmax.xlane.f32.xlu0 %v256
  %v285 = vpop.xlane.xlu0 %284
  %286 = vmax.xlane.f32.xlu0 %v257
  %v287 = vpop.xlane.xlu0 %286
  %288 = vmax.xlane.f32.xlu0 %v258
  %v289 = vpop.xlane.xlu0 %288
  %290 = vmax.xlane.f32.xlu0 %v259
  %v291 = vpop.xlane.xlu0 %290
  %v292 = vsub.f32 %v244, %v261
  %v293 = vsub.f32 %v245, %v263
  %v294 = vsub.f32 %v246, %v265
  %v295 = vsub.f32 %v247, %v267
  %v296 = vsub.f32 %v248, %v269
  %v297 = vsub.f32 %v249, %v271
  %v298 = vsub.f32 %v250, %v273
  %v299 = vsub.f32 %v251, %v275
  %v300 = vsub.f32 %v252, %v277
  %v301 = vsub.f32 %v253, %v279
  %v302 = vsub.f32 %v254, %v281
  %v303 = vsub.f32 %v255, %v283
  %v304 = vsub.f32 %v256, %v285
  %v305 = vsub.f32 %v257, %v287
  %v306 = vsub.f32 %v258, %v289
  %v307 = vsub.f32 %v259, %v291
  %v308 = vmul.f32 %v292, 1.442695
  %v309 = vpow.pop %v308
  %v310 = vmul.f32 %v293, 1.442695
  %v311 = vpow.pop %v310
  %v312 = vmul.f32 %v294, 1.442695
  %v313 = vpow.pop %v312
  %v314 = vmul.f32 %v295, 1.442695
  %v315 = vpow.pop %v314
  %v316 = vmul.f32 %v296, 1.442695
  %v317 = vpow.pop %v316
  %v318 = vmul.f32 %v297, 1.442695
  %v319 = vpow.pop %v318
  %v320 = vmul.f32 %v298, 1.442695
  %v321 = vpow.pop %v320
  %v322 = vmul.f32 %v299, 1.442695
  %v323 = vpow.pop %v322
  %v324 = vmul.f32 %v300, 1.442695
  %v325 = vpow.pop %v324
  %v326 = vmul.f32 %v301, 1.442695
  %v327 = vpow.pop %v326
  %v328 = vmul.f32 %v302, 1.442695
  %v329 = vpow.pop %v328
  %v330 = vmul.f32 %v303, 1.442695
  %v331 = vpow.pop %v330
  %v332 = vmul.f32 %v304, 1.442695
  %v333 = vpow.pop %v332
  %v334 = vmul.f32 %v305, 1.442695
  %v335 = vpow.pop %v334
  %v336 = vmul.f32 %v306, 1.442695
  %v337 = vpow.pop %v336
  %v338 = vmul.f32 %v307, 1.442695
  %v339 = vpow.pop %v338
  %340 = vadd.xlane.f32.xlu0 %v309
  %v341 = vpop.xlane.xlu0 %340
  %342 = vadd.xlane.f32.xlu0 %v311
  %v343 = vpop.xlane.xlu0 %342
  %344 = vadd.xlane.f32.xlu0 %v313
  %v345 = vpop.xlane.xlu0 %344
  %346 = vadd.xlane.f32.xlu0 %v315
  %v347 = vpop.xlane.xlu0 %346
  %348 = vadd.xlane.f32.xlu0 %v317
  %v349 = vpop.xlane.xlu0 %348
  %350 = vadd.xlane.f32.xlu0 %v319
  %v351 = vpop.xlane.xlu0 %350
  %352 = vadd.xlane.f32.xlu0 %v321
  %v353 = vpop.xlane.xlu0 %352
  %354 = vadd.xlane.f32.xlu0 %v323
  %v355 = vpop.xlane.xlu0 %354
  %356 = vadd.xlane.f32.xlu0 %v325
  %v357 = vpop.xlane.xlu0 %356
  %358 = vadd.xlane.f32.xlu0 %v327
  %v359 = vpop.xlane.xlu0 %358
  %360 = vadd.xlane.f32.xlu0 %v329
  %v361 = vpop.xlane.xlu0 %360
  %362 = vadd.xlane.f32.xlu0 %v331
  %v363 = vpop.xlane.xlu0 %362
  %364 = vadd.xlane.f32.xlu0 %v333
  %v365 = vpop.xlane.xlu0 %364
  %366 = vadd.xlane.f32.xlu0 %v335
  %v367 = vpop.xlane.xlu0 %366
  %368 = vadd.xlane.f32.xlu0 %v337
  %v369 = vpop.xlane.xlu0 %368
  %370 = vadd.xlane.f32.xlu0 %v339
  %v371 = vpop.xlane.xlu0 %370
  %v372 = vlog2.pop %v341
  %v373 = vmul.f32 %v372, 0.6931472
  %v374 = vlog2.pop %v343
  %v375 = vmul.f32 %v374, 0.6931472
  %v376 = vlog2.pop %v345
  %v377 = vmul.f32 %v376, 0.6931472
  %v378 = vlog2.pop %v347
  %v379 = vmul.f32 %v378, 0.6931472
  %v380 = vlog2.pop %v349
  %v381 = vmul.f32 %v380, 0.6931472
  %v382 = vlog2.pop %v351
  %v383 = vmul.f32 %v382, 0.6931472
  %v384 = vlog2.pop %v353
  %v385 = vmul.f32 %v384, 0.6931472
  %v386 = vlog2.pop %v355
  %v387 = vmul.f32 %v386, 0.6931472
  %v388 = vlog2.pop %v357
  %v389 = vmul.f32 %v388, 0.6931472
  %v390 = vlog2.pop %v359
  %v391 = vmul.f32 %v390, 0.6931472
  %v392 = vlog2.pop %v361
  %v393 = vmul.f32 %v392, 0.6931472
  %v394 = vlog2.pop %v363
  %v395 = vmul.f32 %v394, 0.6931472
  %v396 = vlog2.pop %v365
  %v397 = vmul.f32 %v396, 0.6931472
  %v398 = vlog2.pop %v367
  %v399 = vmul.f32 %v398, 0.6931472
  %v400 = vlog2.pop %v369
  %v401 = vmul.f32 %v400, 0.6931472
  %v402 = vlog2.pop %v371
  %v403 = vmul.f32 %v402, 0.6931472
  %v404 = vsub.f32 %v292, %v373
  %v405 = vsub.f32 %v293, %v375
  %v406 = vsub.f32 %v294, %v377
  %v407 = vsub.f32 %v295, %v379
  %v408 = vsub.f32 %v296, %v381
  %v409 = vsub.f32 %v297, %v383
  %v410 = vsub.f32 %v298, %v385
  %v411 = vsub.f32 %v299, %v387
  %v412 = vsub.f32 %v300, %v389
  %v413 = vsub.f32 %v301, %v391
  %v414 = vsub.f32 %v302, %v393
  %v415 = vsub.f32 %v303, %v395
  %v416 = vsub.f32 %v304, %v397
  %v417 = vsub.f32 %v305, %v399
  %v418 = vsub.f32 %v306, %v401
  %v419 = vsub.f32 %v307, %v403
  %420 = vst [vmem:[%s3] sm:$0xff] %v404
  %421 = vst [vmem:[%s3 + $0x8] sm:$0xff] %v405
  %422 = vst [vmem:[%s3 + $0x10] sm:$0xff] %v406
  %423 = vst [vmem:[%s3 + $0x18] sm:$0xff] %v407
  %424 = vst [vmem:[%s3 + $0x20] sm:$0xff] %v408
  %425 = vst [vmem:[%s3 + $0x28] sm:$0xff] %v409
  %426 = vst [vmem:[%s3 + $0x30] sm:$0xff] %v410
  %427 = vst [vmem:[%s3 + $0x38] sm:$0xff] %v411
  %428 = vst [vmem:[%s3 + $0x40] sm:$0xff] %v412
  %429 = vst [vmem:[%s3 + $0x48] sm:$0xff] %v413
  %430 = vst [vmem:[%s3 + $0x50] sm:$0xff] %v414
  %431 = vst [vmem:[%s3 + $0x58] sm:$0xff] %v415
  %432 = vst [vmem:[%s3 + $0x60] sm:$0xff] %v416
  %433 = vst [vmem:[%s3 + $0x68] sm:$0xff] %v417
  %434 = vst [vmem:[%s3 + $0x70] sm:$0xff] %v418
  %435 = vst [vmem:[%s3 + $0x78] sm:$0xff] %v419
  // Predicated region
  $region14: #{gat_forward.9} parent=0 // pred_check
    _
  $region15: #{gat_forward.9} parent=0 // pred_check_branch
    %437 = sbr.rel (0) target = $region17
  $region16: #{gat_forward.9} parent=0 // pred_region
    _
  $region17: #{gat_forward.9} parent=0 // pred_fallthru
    _
  // Predicated region
  $region18: #{gat_forward.9} parent=0 // pred_check
    _
  $region19: #{gat_forward.9} parent=0 // pred_check_branch
    %439 = sbr.rel (0) target = $region21
  $region20: #{gat_forward.9} parent=0 // pred_region
    _
  $region21: #{gat_forward.9} parent=0 // pred_fallthru
    _
  // Predicated region
  $region22: #{gat_forward.9} parent=0 // pred_check
    _
  $region23: #{gat_forward.9} parent=0 // pred_check_branch
    %441 = sbr.rel (0) target = $region25
  $region24: #{gat_forward.9} parent=0 // pred_region
    _
  $region25: #{gat_forward.9} parent=0 // pred_fallthru
    _
  // Predicated region
  $region26: #{gat_forward.9} parent=0 // pred_check
    _
  $region27: #{gat_forward.9} parent=0 // pred_check_branch
    %443 = sbr.rel (0) target = $region29
  $region28: #{gat_forward.9} parent=0 // pred_region
    _
  $region29: #{gat_forward.9} parent=0 // pred_fallthru
    _

// kernel: gat_forward.5
$region0: #{gat_forward.5}
  #allocation0 [shape = 'u32[]', space=smem, size = 0x4, offset = 0x4, fixed_abs, tag = 'smem constant byte address 0x4 - core index']
  #allocation1 [shape = 'u32[144,128]{1,0:T(1,128)}', space=vmem, size = 0x12000, scoped, tag = 'internal scratch']
  %s0 = inlined_call_operand.hbm [shape: f32[128,128], index: 0, kind: input, shape index: {}]
  %s1 = inlined_call_operand.hbm [shape: bf16[128,128], index: 1, kind: input, shape index: {}]
  %s2 = inlined_call_operand.vmem [shape: f32[128,128], index: 2, kind: output, shape index: {}]
  %s3 = sld [smem:[#allocation0]]
  $region26: #{gat_forward.5} parent=0
    _
  %s5 = ssub.s32 1, %s3
  %s6 = scalar_select 0, %s5, %s3
  $region1: #{gat_forward.5} parent=0
    #allocation2 [shape = 'u8[65536]{0}', space=vmem, size = 0x10000, scoped, tag = 'input window, operand 0, single buffered']
    #allocation3 [shape = 's32[1]{0}', space=sflag, size = 0x4, scoped, tag = 'scoped memory for gat_forward.5']
    #allocation4 [shape = 'u8[32768]{0}', space=vmem, size = 0x8000, scoped, tag = 'input window, operand 1, single buffered']
    #allocation5 [shape = 's32[1]{0}', space=sflag, size = 0x4, scoped, tag = 'scoped memory for gat_forward.5']
    %7 = vsyncpa [#allocation3], 0
    %8 = vsyncpa [#allocation5], 0
    // Predicated region
    $region2: #{gat_forward.5} parent=1 // pred_check
      _
    $region3: #{gat_forward.5} parent=1 // pred_check_branch
      %10 = sbr.rel (0) target = $region5
    $region4: #{gat_forward.5} parent=1 // pred_region
      %s12 = ssub.s32 2048, 2048
      %13 = vsyncadd [#allocation3], %s12
      %s14 = sshll.u32 [#allocation2], 4
      %s15 = int_to_ptr.vmem [resolvable:$true] %s14
      %20 = dma.hbm_to_vmem [thread:$0]  %s0, 2048, %s15, [#allocation3], 128, 128, 8
    $region5: #{gat_forward.5} parent=1 // pred_fallthru
      _
    // Predicated region
    $region6: #{gat_forward.5} parent=1 // pred_check
      _
    $region7: #{gat_forward.5} parent=1 // pred_check_branch
      %22 = sbr.rel (0) target = $region9
    $region8: #{gat_forward.5} parent=1 // pred_region
      %s24 = ssub.s32 1024, 1024
      %25 = vsyncadd [#allocation5], %s24
      %s26 = sshll.u32 [#allocation4], 4
      %s27 = int_to_ptr.vmem [resolvable:$true] %s26
      %32 = dma.hbm_to_vmem [thread:$0]  %s1, 1024, %s27, [#allocation5], 64, 64, 4
    $region9: #{gat_forward.5} parent=1 // pred_fallthru
      _
    // Predicated region
    $region10: #{gat_forward.5} parent=1 // pred_check
      _
    $region11: #{gat_forward.5} parent=1 // pred_check_branch
      %34 = sbr.rel (0) target = $region13
    $region12: #{gat_forward.5} parent=1 // pred_region
      %35 = dma.done [#allocation3], 2048
    $region13: #{gat_forward.5} parent=1 // pred_fallthru
      _
    // Predicated region
    $region14: #{gat_forward.5} parent=1 // pred_check
      _
    $region15: #{gat_forward.5} parent=1 // pred_check_branch
      %37 = sbr.rel (0) target = $region17
    $region16: #{gat_forward.5} parent=1 // pred_region
      %38 = dma.done [#allocation5], 1024
    $region17: #{gat_forward.5} parent=1 // pred_fallthru
      _
    %v40 = vld [vmem:[#allocation2] sm:$0xff]
    %v41 = vld [vmem:[#allocation2 + $0x8] sm:$0xff]
    %v42 = vld [vmem:[#allocation2 + $0x10] sm:$0xff]
    %v43 = vld [vmem:[#allocation2 + $0x18] sm:$0xff]
    %v44 = vld [vmem:[#allocation2 + $0x20] sm:$0xff]
    %v45 = vld [vmem:[#allocation2 + $0x28] sm:$0xff]
    %v46 = vld [vmem:[#allocation2 + $0x30] sm:$0xff]
    %v47 = vld [vmem:[#allocation2 + $0x38] sm:$0xff]
    %v48 = vld [vmem:[#allocation2 + $0x40] sm:$0xff]
    %v49 = vld [vmem:[#allocation2 + $0x48] sm:$0xff]
    %v50 = vld [vmem:[#allocation2 + $0x50] sm:$0xff]
    %v51 = vld [vmem:[#allocation2 + $0x58] sm:$0xff]
    %v52 = vld [vmem:[#allocation2 + $0x60] sm:$0xff]
    %v53 = vld [vmem:[#allocation2 + $0x68] sm:$0xff]
    %v54 = vld [vmem:[#allocation2 + $0x70] sm:$0xff]
    %v55 = vld [vmem:[#allocation2 + $0x78] sm:$0xff]
    %v56 = vpack.c.bf16 %v41, %v40
    %v57 = vpack.c.bf16 %v43, %v42
    %v58 = vpack.c.bf16 %v45, %v44
    %v59 = vpack.c.bf16 %v47, %v46
    %v60 = vpack.c.bf16 %v49, %v48
    %v61 = vpack.c.bf16 %v51, %v50
    %v62 = vpack.c.bf16 %v53, %v52
    %v63 = vpack.c.bf16 %v55, %v54
    %v64 = vld [vmem:[#allocation4] sm:$0xf]
    %v65 = vld [vmem:[#allocation4 + $0x4] sm:$0xf]
    %v66 = vld [vmem:[#allocation4 + $0x8] sm:$0xf]
    %v67 = vld [vmem:[#allocation4 + $0xc] sm:$0xf]
    %v68 = vld [vmem:[#allocation4 + $0x10] sm:$0xf]
    %v69 = vld [vmem:[#allocation4 + $0x14] sm:$0xf]
    %v70 = vld [vmem:[#allocation4 + $0x18] sm:$0xf]
    %v71 = vld [vmem:[#allocation4 + $0x1c] sm:$0xf]
    %v72 = vld [vmem:[#allocation4 + $0x20] sm:$0xf]
    %v73 = vld [vmem:[#allocation4 + $0x24] sm:$0xf]
    %v74 = vld [vmem:[#allocation4 + $0x28] sm:$0xf]
    %v75 = vld [vmem:[#allocation4 + $0x2c] sm:$0xf]
    %v76 = vld [vmem:[#allocation4 + $0x30] sm:$0xf]
    %v77 = vld [vmem:[#allocation4 + $0x34] sm:$0xf]
    %v78 = vld [vmem:[#allocation4 + $0x38] sm:$0xf]
    %v79 = vld [vmem:[#allocation4 + $0x3c] sm:$0xf]
    %v96 = vunpack.c.l.b16 %v64
    %v97 = vunpack.c.l.b16 %v65
    %v98 = vunpack.c.l.b16 %v66
    %v99 = vunpack.c.l.b16 %v67
    %v100 = vunpack.c.l.b16 %v68
    %v101 = vunpack.c.l.b16 %v69
    %v102 = vunpack.c.l.b16 %v70
    %v103 = vunpack.c.l.b16 %v71
    %v104 = vunpack.c.l.b16 %v72
    %v105 = vunpack.c.l.b16 %v73
    %v106 = vunpack.c.l.b16 %v74
    %v107 = vunpack.c.l.b16 %v75
    %v108 = vunpack.c.l.b16 %v76
    %v109 = vunpack.c.l.b16 %v77
    %v110 = vunpack.c.l.b16 %v78
    %v111 = vunpack.c.l.b16 %v79
    %v112 = vpack.c.b16 %v97, %v96
    %v113 = vpack.c.b16 %v99, %v98
    %v114 = vpack.c.b16 %v101, %v100
    %v115 = vpack.c.b16 %v103, %v102
    %v116 = vpack.c.b16 %v105, %v104
    %v117 = vpack.c.b16 %v107, %v106
    %v118 = vpack.c.b16 %v109, %v108
    %v119 = vpack.c.b16 %v111, %v110
    %128 = vmatprep.subr.bf16.mxu0 0
    %129 = vmatpush1.bf16.msra.mxu0 %v119
    %130 = vmatprep.subr.bf16.mxu0 0
    %131 = vmatpush1.bf16.msra.mxu0 %v118
    %132 = vmatprep.subr.bf16.mxu0 0
    %133 = vmatpush1.bf16.msra.mxu0 %v117
    %134 = vmatprep.subr.bf16.mxu0 0
    %135 = vmatpush1.bf16.msra.mxu0 %v116
    %136 = vmatprep.subr.bf16.mxu0 0
    %137 = vmatpush1.bf16.msra.mxu0 %v115
    %138 = vmatprep.subr.bf16.mxu0 0
    %139 = vmatpush1.bf16.msra.mxu0 %v114
    %140 = vmatprep.subr.bf16.mxu0 0
    %141 = vmatpush1.bf16.msra.mxu0 %v113
    %142 = vmatprep.subr.bf16.mxu0 0
    %143 = vmatpush1.bf16.msra.mxu0 %v112
    %144 = vmatprep.subr.bf16.mxu0 0
    %145 = vmatpush2.bf16.msra.mxu0 0
    %146 = vmatprep.subr.bf16.mxu0 0
    %147 = vmatpush2.bf16.msra.mxu0 0
    %148 = vmatprep.subr.bf16.mxu0 0
    %149 = vmatpush2.bf16.msra.mxu0 0
    %150 = vmatprep.subr.bf16.mxu0 0
    %151 = vmatpush2.bf16.msra.mxu0 0
    %152 = vmatprep.subr.bf16.mxu0 0
    %153 = vmatpush2.bf16.msra.mxu0 0
    %154 = vmatprep.subr.bf16.mxu0 0
    %155 = vmatpush2.bf16.msra.mxu0 0
    %156 = vmatprep.subr.bf16.mxu0 0
    %157 = vmatpush2.bf16.msra.mxu0 0
    %158 = vmatprep.subr.bf16.mxu0 0
    %159 = vmatpush2.bf16.msra.mxu0 0
    %160 = vmatprep.mubr.bf16.mxu0 0
    %161 = vmatmul.mubr.bf16.gmra.mxu0 %v56
    %v162 = vpop.f32.mrf.mxu0
    %v163 = vadd.f32 0.0, %v162
    %v164 = vpop.f32.mrf.mxu0
    %v165 = vpop.f32.mrf.mxu0
    %v166 = vadd.f32 0.0, %v165
    %v167 = vpop.f32.mrf.mxu0
    %168 = vmatprep.mubr.bf16.mxu0 0
    %169 = vmatmul.mubr.bf16.gmra.mxu0 %v57
    %v170 = vpop.f32.mrf.mxu0
    %v171 = vadd.f32 0.0, %v170
    %v172 = vpop.f32.mrf.mxu0
    %v173 = vpop.f32.mrf.mxu0
    %v174 = vadd.f32 0.0, %v173
    %v175 = vpop.f32.mrf.mxu0
    %176 = vmatprep.mubr.bf16.mxu0 0
    %177 = vmatmul.mubr.bf16.gmra.mxu0 %v58
    %v178 = vpop.f32.mrf.mxu0
    %v179 = vadd.f32 0.0, %v178
    %v180 = vpop.f32.mrf.mxu0
    %v181 = vpop.f32.mrf.mxu0
    %v182 = vadd.f32 0.0, %v181
    %v183 = vpop.f32.mrf.mxu0
    %184 = vmatprep.mubr.bf16.mxu0 0
    %185 = vmatmul.mubr.bf16.gmra.mxu0 %v59
    %v186 = vpop.f32.mrf.mxu0
    %v187 = vadd.f32 0.0, %v186
    %v188 = vpop.f32.mrf.mxu0
    %v189 = vpop.f32.mrf.mxu0
    %v190 = vadd.f32 0.0, %v189
    %v191 = vpop.f32.mrf.mxu0
    %192 = vmatprep.mubr.bf16.mxu0 0
    %193 = vmatmul.mubr.bf16.gmra.mxu0 %v60
    %v194 = vpop.f32.mrf.mxu0
    %v195 = vadd.f32 0.0, %v194
    %v196 = vpop.f32.mrf.mxu0
    %v197 = vpop.f32.mrf.mxu0
    %v198 = vadd.f32 0.0, %v197
    %v199 = vpop.f32.mrf.mxu0
    %200 = vmatprep.mubr.bf16.mxu0 0
    %201 = vmatmul.mubr.bf16.gmra.mxu0 %v61
    %v202 = vpop.f32.mrf.mxu0
    %v203 = vadd.f32 0.0, %v202
    %v204 = vpop.f32.mrf.mxu0
    %v205 = vpop.f32.mrf.mxu0
    %v206 = vadd.f32 0.0, %v205
    %v207 = vpop.f32.mrf.mxu0
    %208 = vmatprep.mubr.bf16.mxu0 0
    %209 = vmatmul.mubr.bf16.gmra.mxu0 %v62
    %v210 = vpop.f32.mrf.mxu0
    %v211 = vadd.f32 0.0, %v210
    %v212 = vpop.f32.mrf.mxu0
    %v213 = vpop.f32.mrf.mxu0
    %v214 = vadd.f32 0.0, %v213
    %v215 = vpop.f32.mrf.mxu0
    %216 = vmatprep.mubr.bf16.mxu0 0
    %217 = vmatmul.mubr.bf16.gmra.mxu0 %v63
    %v218 = vpop.f32.mrf.mxu0
    %v219 = vadd.f32 0.0, %v218
    %v220 = vpop.f32.mrf.mxu0
    %v221 = vpop.f32.mrf.mxu0
    %v222 = vadd.f32 0.0, %v221
    %v223 = vpop.f32.mrf.mxu0
    %224 = vdwg.mxu0
    %225 = vst [vmem:[%s2] sm:$0xff] %v163
    %226 = vst [vmem:[%s2 + $0x8] sm:$0xff] %v166
    %227 = vst [vmem:[%s2 + $0x10] sm:$0xff] %v171
    %228 = vst [vmem:[%s2 + $0x18] sm:$0xff] %v174
    %229 = vst [vmem:[%s2 + $0x20] sm:$0xff] %v179
    %230 = vst [vmem:[%s2 + $0x28] sm:$0xff] %v182
    %231 = vst [vmem:[%s2 + $0x30] sm:$0xff] %v187
    %232 = vst [vmem:[%s2 + $0x38] sm:$0xff] %v190
    %233 = vst [vmem:[%s2 + $0x40] sm:$0xff] %v195
    %234 = vst [vmem:[%s2 + $0x48] sm:$0xff] %v198
    %235 = vst [vmem:[%s2 + $0x50] sm:$0xff] %v203
    %236 = vst [vmem:[%s2 + $0x58] sm:$0xff] %v206
    %237 = vst [vmem:[%s2 + $0x60] sm:$0xff] %v211
    %238 = vst [vmem:[%s2 + $0x68] sm:$0xff] %v214
    %239 = vst [vmem:[%s2 + $0x70] sm:$0xff] %v219
    %240 = vst [vmem:[%s2 + $0x78] sm:$0xff] %v222
    // Predicated region
    $region18: #{gat_forward.5} parent=1 // pred_check
      _
    $region19: #{gat_forward.5} parent=1 // pred_check_branch
      %242 = sbr.rel (0) target = $region21
    $region20: #{gat_forward.5} parent=1 // pred_region
      _
    $region21: #{gat_forward.5} parent=1 // pred_fallthru
      _
    // Predicated region
    $region22: #{gat_forward.5} parent=1 // pred_check
      _
    $region23: #{gat_forward.5} parent=1 // pred_check_branch
      %244 = sbr.rel (0) target = $region25
    $region24: #{gat_forward.5} parent=1 // pred_region
      _
    $region25: #{gat_forward.5} parent=1 // pred_fallthru
      _
    %245 = vsyncpa [#allocation3], 1
    %246 = vsyncpa [#allocation5], 1

// kernel: gat_forward.7
$region0: #{gat_forward.7}
  #allocation0 [shape = 'u32[]', space=smem, size = 0x4, offset = 0x4, fixed_abs, tag = 'smem constant byte address 0x4 - core index']
  #allocation1 [shape = 'u32[144,128]{1,0:T(1,128)}', space=vmem, size = 0x12000, scoped, tag = 'internal scratch']
  %s0 = inlined_call_operand.vmem [shape: f32[128,128], index: 0, kind: input, shape index: {}]
  %s1 = inlined_call_operand.vmem [shape: bf16[128,128], index: 1, kind: input, shape index: {}]
  %s2 = inlined_call_operand.vmem [shape: f32[128,128], index: 2, kind: output, shape index: {}]
  %s3 = sld [smem:[#allocation0]]
  $region18: #{gat_forward.7} parent=0
    _
  %s5 = ssub.s32 1, %s3
  %s6 = scalar_select 0, %s5, %s3
  // Predicated region
  $region2: #{gat_forward.7} parent=0 // pred_check
    _
  $region3: #{gat_forward.7} parent=0 // pred_check_branch
    %8 = sbr.rel (0) target = $region5
  $region4: #{gat_forward.7} parent=0 // pred_region
    _
  $region5: #{gat_forward.7} parent=0 // pred_fallthru
    _
  // Predicated region
  $region6: #{gat_forward.7} parent=0 // pred_check
    _
  $region7: #{gat_forward.7} parent=0 // pred_check_branch
    %10 = sbr.rel (0) target = $region9
  $region8: #{gat_forward.7} parent=0 // pred_region
    _
  $region9: #{gat_forward.7} parent=0 // pred_fallthru
    _
  %v12 = vld [vmem:[%s0] sm:$0xff]
  %v13 = vld [vmem:[%s0 + $0x8] sm:$0xff]
  %v14 = vld [vmem:[%s0 + $0x10] sm:$0xff]
  %v15 = vld [vmem:[%s0 + $0x18] sm:$0xff]
  %v16 = vld [vmem:[%s0 + $0x20] sm:$0xff]
  %v17 = vld [vmem:[%s0 + $0x28] sm:$0xff]
  %v18 = vld [vmem:[%s0 + $0x30] sm:$0xff]
  %v19 = vld [vmem:[%s0 + $0x38] sm:$0xff]
  %v20 = vld [vmem:[%s0 + $0x40] sm:$0xff]
  %v21 = vld [vmem:[%s0 + $0x48] sm:$0xff]
  %v22 = vld [vmem:[%s0 + $0x50] sm:$0xff]
  %v23 = vld [vmem:[%s0 + $0x58] sm:$0xff]
  %v24 = vld [vmem:[%s0 + $0x60] sm:$0xff]
  %v25 = vld [vmem:[%s0 + $0x68] sm:$0xff]
  %v26 = vld [vmem:[%s0 + $0x70] sm:$0xff]
  %v27 = vld [vmem:[%s0 + $0x78] sm:$0xff]
  %v28 = vpack.c.bf16 %v13, %v12
  %v29 = vpack.c.bf16 %v15, %v14
  %v30 = vpack.c.bf16 %v17, %v16
  %v31 = vpack.c.bf16 %v19, %v18
  %v32 = vpack.c.bf16 %v21, %v20
  %v33 = vpack.c.bf16 %v23, %v22
  %v34 = vpack.c.bf16 %v25, %v24
  %v35 = vpack.c.bf16 %v27, %v26
  %v36 = vld [vmem:[%s1] sm:$0xf]
  %v37 = vld [vmem:[%s1 + $0x4] sm:$0xf]
  %v38 = vld [vmem:[%s1 + $0x8] sm:$0xf]
  %v39 = vld [vmem:[%s1 + $0xc] sm:$0xf]
  %v40 = vld [vmem:[%s1 + $0x10] sm:$0xf]
  %v41 = vld [vmem:[%s1 + $0x14] sm:$0xf]
  %v42 = vld [vmem:[%s1 + $0x18] sm:$0xf]
  %v43 = vld [vmem:[%s1 + $0x1c] sm:$0xf]
  %v44 = vld [vmem:[%s1 + $0x20] sm:$0xf]
  %v45 = vld [vmem:[%s1 + $0x24] sm:$0xf]
  %v46 = vld [vmem:[%s1 + $0x28] sm:$0xf]
  %v47 = vld [vmem:[%s1 + $0x2c] sm:$0xf]
  %v48 = vld [vmem:[%s1 + $0x30] sm:$0xf]
  %v49 = vld [vmem:[%s1 + $0x34] sm:$0xf]
  %v50 = vld [vmem:[%s1 + $0x38] sm:$0xf]
  %v51 = vld [vmem:[%s1 + $0x3c] sm:$0xf]
  %v68 = vunpack.c.l.b16 %v36
  %v69 = vunpack.c.l.b16 %v37
  %v70 = vunpack.c.l.b16 %v38
  %v71 = vunpack.c.l.b16 %v39
  %v72 = vunpack.c.l.b16 %v40
  %v73 = vunpack.c.l.b16 %v41
  %v74 = vunpack.c.l.b16 %v42
  %v75 = vunpack.c.l.b16 %v43
  %v76 = vunpack.c.l.b16 %v44
  %v77 = vunpack.c.l.b16 %v45
  %v78 = vunpack.c.l.b16 %v46
  %v79 = vunpack.c.l.b16 %v47
  %v80 = vunpack.c.l.b16 %v48
  %v81 = vunpack.c.l.b16 %v49
  %v82 = vunpack.c.l.b16 %v50
  %v83 = vunpack.c.l.b16 %v51
  %v84 = vpack.c.b16 %v69, %v68
  %v85 = vpack.c.b16 %v71, %v70
  %v86 = vpack.c.b16 %v73, %v72
  %v87 = vpack.c.b16 %v75, %v74
  %v88 = vpack.c.b16 %v77, %v76
  %v89 = vpack.c.b16 %v79, %v78
  %v90 = vpack.c.b16 %v81, %v80
  %v91 = vpack.c.b16 %v83, %v82
  %100 = vmatprep.subr.bf16.mxu0 0
  %101 = vmatpush1.bf16.msra.mxu0 %v91
  %102 = vmatprep.subr.bf16.mxu0 0
  %103 = vmatpush1.bf16.msra.mxu0 %v90
  %104 = vmatprep.subr.bf16.mxu0 0
  %105 = vmatpush1.bf16.msra.mxu0 %v89
  %106 = vmatprep.subr.bf16.mxu0 0
  %107 = vmatpush1.bf16.msra.mxu0 %v88
  %108 = vmatprep.subr.bf16.mxu0 0
  %109 = vmatpush1.bf16.msra.mxu0 %v87
  %110 = vmatprep.subr.bf16.mxu0 0
  %111 = vmatpush1.bf16.msra.mxu0 %v86
  %112 = vmatprep.subr.bf16.mxu0 0
  %113 = vmatpush1.bf16.msra.mxu0 %v85
  %114 = vmatprep.subr.bf16.mxu0 0
  %115 = vmatpush1.bf16.msra.mxu0 %v84
  %116 = vmatprep.subr.bf16.mxu0 0
  %117 = vmatpush2.bf16.msra.mxu0 0
  %118 = vmatprep.subr.bf16.mxu0 0
  %119 = vmatpush2.bf16.msra.mxu0 0
  %120 = vmatprep.subr.bf16.mxu0 0
  %121 = vmatpush2.bf16.msra.mxu0 0
  %122 = vmatprep.subr.bf16.mxu0 0
  %123 = vmatpush2.bf16.msra.mxu0 0
  %124 = vmatprep.subr.bf16.mxu0 0
  %125 = vmatpush2.bf16.msra.mxu0 0
  %126 = vmatprep.subr.bf16.mxu0 0
  %127 = vmatpush2.bf16.msra.mxu0 0
  %128 = vmatprep.subr.bf16.mxu0 0
  %129 = vmatpush2.bf16.msra.mxu0 0
  %130 = vmatprep.subr.bf16.mxu0 0
  %131 = vmatpush2.bf16.msra.mxu0 0
  %132 = vmatprep.mubr.bf16.mxu0 0
  %133 = vmatmul.mubr.bf16.gmra.mxu0 %v28
  %v134 = vpop.f32.mrf.mxu0
  %v135 = vadd.f32 0.0, %v134
  %v136 = vpop.f32.mrf.mxu0
  %v137 = vpop.f32.mrf.mxu0
  %v138 = vadd.f32 0.0, %v137
  %v139 = vpop.f32.mrf.mxu0
  %140 = vmatprep.mubr.bf16.mxu0 0
  %141 = vmatmul.mubr.bf16.gmra.mxu0 %v29
  %v142 = vpop.f32.mrf.mxu0
  %v143 = vadd.f32 0.0, %v142
  %v144 = vpop.f32.mrf.mxu0
  %v145 = vpop.f32.mrf.mxu0
  %v146 = vadd.f32 0.0, %v145
  %v147 = vpop.f32.mrf.mxu0
  %148 = vmatprep.mubr.bf16.mxu0 0
  %149 = vmatmul.mubr.bf16.gmra.mxu0 %v30
  %v150 = vpop.f32.mrf.mxu0
  %v151 = vadd.f32 0.0, %v150
  %v152 = vpop.f32.mrf.mxu0
  %v153 = vpop.f32.mrf.mxu0
  %v154 = vadd.f32 0.0, %v153
  %v155 = vpop.f32.mrf.mxu0
  %156 = vmatprep.mubr.bf16.mxu0 0
  %157 = vmatmul.mubr.bf16.gmra.mxu0 %v31
  %v158 = vpop.f32.mrf.mxu0
  %v159 = vadd.f32 0.0, %v158
  %v160 = vpop.f32.mrf.mxu0
  %v161 = vpop.f32.mrf.mxu0
  %v162 = vadd.f32 0.0, %v161
  %v163 = vpop.f32.mrf.mxu0
  %164 = vmatprep.mubr.bf16.mxu0 0
  %165 = vmatmul.mubr.bf16.gmra.mxu0 %v32
  %v166 = vpop.f32.mrf.mxu0
  %v167 = vadd.f32 0.0, %v166
  %v168 = vpop.f32.mrf.mxu0
  %v169 = vpop.f32.mrf.mxu0
  %v170 = vadd.f32 0.0, %v169
  %v171 = vpop.f32.mrf.mxu0
  %172 = vmatprep.mubr.bf16.mxu0 0
  %173 = vmatmul.mubr.bf16.gmra.mxu0 %v33
  %v174 = vpop.f32.mrf.mxu0
  %v175 = vadd.f32 0.0, %v174
  %v176 = vpop.f32.mrf.mxu0
  %v177 = vpop.f32.mrf.mxu0
  %v178 = vadd.f32 0.0, %v177
  %v179 = vpop.f32.mrf.mxu0
  %180 = vmatprep.mubr.bf16.mxu0 0
  %181 = vmatmul.mubr.bf16.gmra.mxu0 %v34
  %v182 = vpop.f32.mrf.mxu0
  %v183 = vadd.f32 0.0, %v182
  %v184 = vpop.f32.mrf.mxu0
  %v185 = vpop.f32.mrf.mxu0
  %v186 = vadd.f32 0.0, %v185
  %v187 = vpop.f32.mrf.mxu0
  %188 = vmatprep.mubr.bf16.mxu0 0
  %189 = vmatmul.mubr.bf16.gmra.mxu0 %v35
  %v190 = vpop.f32.mrf.mxu0
  %v191 = vadd.f32 0.0, %v190
  %v192 = vpop.f32.mrf.mxu0
  %v193 = vpop.f32.mrf.mxu0
  %v194 = vadd.f32 0.0, %v193
  %v195 = vpop.f32.mrf.mxu0
  %196 = vdwg.mxu0
  %197 = vst [vmem:[%s2] sm:$0xff] %v135
  %198 = vst [vmem:[%s2 + $0x8] sm:$0xff] %v138
  %199 = vst [vmem:[%s2 + $0x10] sm:$0xff] %v143
  %200 = vst [vmem:[%s2 + $0x18] sm:$0xff] %v146
  %201 = vst [vmem:[%s2 + $0x20] sm:$0xff] %v151
  %202 = vst [vmem:[%s2 + $0x28] sm:$0xff] %v154
  %203 = vst [vmem:[%s2 + $0x30] sm:$0xff] %v159
  %204 = vst [vmem:[%s2 + $0x38] sm:$0xff] %v162
  %205 = vst [vmem:[%s2 + $0x40] sm:$0xff] %v167
  %206 = vst [vmem:[%s2 + $0x48] sm:$0xff] %v170
  %207 = vst [vmem:[%s2 + $0x50] sm:$0xff] %v175
  %208 = vst [vmem:[%s2 + $0x58] sm:$0xff] %v178
  %209 = vst [vmem:[%s2 + $0x60] sm:$0xff] %v183
  %210 = vst [vmem:[%s2 + $0x68] sm:$0xff] %v186
  %211 = vst [vmem:[%s2 + $0x70] sm:$0xff] %v191
  %212 = vst [vmem:[%s2 + $0x78] sm:$0xff] %v194
  // Predicated region
  $region10: #{gat_forward.7} parent=0 // pred_check
    _
  $region11: #{gat_forward.7} parent=0 // pred_check_branch
    %214 = sbr.rel (0) target = $region13
  $region12: #{gat_forward.7} parent=0 // pred_region
    _
  $region13: #{gat_forward.7} parent=0 // pred_fallthru
    _
  // Predicated region
  $region14: #{gat_forward.7} parent=0 // pred_check
    _
  $region15: #{gat_forward.7} parent=0 // pred_check_branch
    %216 = sbr.rel (0) target = $region17
  $region16: #{gat_forward.7} parent=0 // pred_region
    _
  $region17: #{gat_forward.7} parent=0 // pred_fallthru
    _

// kernel: gat_forward.6
$region0: #{gat_forward.6}
  #allocation0 [shape = 'u32[]', space=smem, size = 0x4, offset = 0x4, fixed_abs, tag = 'smem constant byte address 0x4 - core index']
  #allocation1 [shape = 'u32[144,128]{1,0:T(1,128)}', space=vmem, size = 0x12000, scoped, tag = 'internal scratch']
  %s0 = inlined_call_operand.vmem [shape: f32[128,128], index: 0, kind: input, shape index: {}, may-alias: {0,1}]
  %s1 = inlined_call_operand.vmem [shape: f32[128,128], index: 1, kind: input, shape index: {}, may-alias: {0,1}]
  %s2 = inlined_call_operand.vmem [shape: bf16[128,128], index: 2, kind: input, shape index: {}]
  %s3 = inlined_call_operand.vmem [shape: f32[1,128], index: 3, kind: input, shape index: {}]
  %s4 = inlined_call_operand.vmem [shape: f32[1,128], index: 4, kind: input, shape index: {}]
  %s5 = inlined_call_operand.vmem [shape: f32[1,128], index: 5, kind: input, shape index: {}]
  %s6 = inlined_call_operand.vmem [shape: f32[128,128], index: 6, kind: output, shape index: {}]
  %s7 = sld [smem:[#allocation0]]
  $region34: #{gat_forward.6} parent=0
    _
  %s9 = ssub.s32 1, %s7
  %s10 = scalar_select 0, %s9, %s7
  // Predicated region
  $region2: #{gat_forward.6} parent=0 // pred_check
    _
  $region3: #{gat_forward.6} parent=0 // pred_check_branch
    %12 = sbr.rel (0) target = $region5
  $region4: #{gat_forward.6} parent=0 // pred_region
    _
  $region5: #{gat_forward.6} parent=0 // pred_fallthru
    _
  // Predicated region
  $region6: #{gat_forward.6} parent=0 // pred_check
    _
  $region7: #{gat_forward.6} parent=0 // pred_check_branch
    %14 = sbr.rel (0) target = $region9
  $region8: #{gat_forward.6} parent=0 // pred_region
    _
  $region9: #{gat_forward.6} parent=0 // pred_fallthru
    _
  // Predicated region
  $region10: #{gat_forward.6} parent=0 // pred_check
    _
  $region11: #{gat_forward.6} parent=0 // pred_check_branch
    %16 = sbr.rel (0) target = $region13
  $region12: #{gat_forward.6} parent=0 // pred_region
    _
  $region13: #{gat_forward.6} parent=0 // pred_fallthru
    _
  // Predicated region
  $region14: #{gat_forward.6} parent=0 // pred_check
    _
  $region15: #{gat_forward.6} parent=0 // pred_check_branch
    %18 = sbr.rel (0) target = $region17
  $region16: #{gat_forward.6} parent=0 // pred_region
    _
  $region17: #{gat_forward.6} parent=0 // pred_fallthru
    _
  // Predicated region
  $region18: #{gat_forward.6} parent=0 // pred_check
    _
  $region19: #{gat_forward.6} parent=0 // pred_check_branch
    %20 = sbr.rel (0) target = $region21
  $region20: #{gat_forward.6} parent=0 // pred_region
    _
  $region21: #{gat_forward.6} parent=0 // pred_fallthru
    _
  // Predicated region
  $region22: #{gat_forward.6} parent=0 // pred_check
    _
  $region23: #{gat_forward.6} parent=0 // pred_check_branch
    %22 = sbr.rel (0) target = $region25
  $region24: #{gat_forward.6} parent=0 // pred_region
    _
  $region25: #{gat_forward.6} parent=0 // pred_fallthru
    _
  %v24 = vld [vmem:[%s0] sm:$0xff]
  %v25 = vld [vmem:[%s0 + $0x8] sm:$0xff]
  %v26 = vld [vmem:[%s0 + $0x10] sm:$0xff]
  %v27 = vld [vmem:[%s0 + $0x18] sm:$0xff]
  %v28 = vld [vmem:[%s0 + $0x20] sm:$0xff]
  %v29 = vld [vmem:[%s0 + $0x28] sm:$0xff]
  %v30 = vld [vmem:[%s0 + $0x30] sm:$0xff]
  %v31 = vld [vmem:[%s0 + $0x38] sm:$0xff]
  %v32 = vld [vmem:[%s0 + $0x40] sm:$0xff]
  %v33 = vld [vmem:[%s0 + $0x48] sm:$0xff]
  %v34 = vld [vmem:[%s0 + $0x50] sm:$0xff]
  %v35 = vld [vmem:[%s0 + $0x58] sm:$0xff]
  %v36 = vld [vmem:[%s0 + $0x60] sm:$0xff]
  %v37 = vld [vmem:[%s0 + $0x68] sm:$0xff]
  %v38 = vld [vmem:[%s0 + $0x70] sm:$0xff]
  %v39 = vld [vmem:[%s0 + $0x78] sm:$0xff]
  %v40 = vld [vmem:[%s3] sm:$0x1]
  %41 = vmatprep.subr.mxu0 0.0
  %42 = vmatpush1.xpose.msra.mxu0 %v39
  %43 = vmatprep.subr.mxu0 0.0
  %44 = vmatpush1.xpose.msra.mxu0 %v38
  %45 = vmatprep.subr.mxu0 0.0
  %46 = vmatpush1.xpose.msra.mxu0 %v37
  %47 = vmatprep.subr.mxu0 0.0
  %48 = vmatpush1.xpose.msra.mxu0 %v36
  %49 = vmatprep.subr.mxu0 0.0
  %50 = vmatpush1.xpose.msra.mxu0 %v35
  %51 = vmatprep.subr.mxu0 0.0
  %52 = vmatpush1.xpose.msra.mxu0 %v34
  %53 = vmatprep.subr.mxu0 0.0
  %54 = vmatpush1.xpose.msra.mxu0 %v33
  %55 = vmatprep.subr.mxu0 0.0
  %56 = vmatpush1.xpose.msra.mxu0 %v32
  %57 = vmatprep.subr.mxu0 0.0
  %58 = vmatpush1.xpose.msra.mxu0 %v31
  %59 = vmatprep.subr.mxu0 0.0
  %60 = vmatpush1.xpose.msra.mxu0 %v30
  %61 = vmatprep.subr.mxu0 0.0
  %62 = vmatpush1.xpose.msra.mxu0 %v29
  %63 = vmatprep.subr.mxu0 0.0
  %64 = vmatpush1.xpose.msra.mxu0 %v28
  %65 = vmatprep.subr.mxu0 0.0
  %66 = vmatpush1.xpose.msra.mxu0 %v27
  %67 = vmatprep.subr.mxu0 0.0
  %68 = vmatpush1.xpose.msra.mxu0 %v26
  %69 = vmatprep.subr.mxu0 0.0
  %70 = vmatpush1.xpose.msra.mxu0 %v25
  %71 = vmatprep.subr.mxu0 0.0
  %72 = vmatpush1.xpose.msra.mxu0 %v24
  %73 = vmatprep.subr.mxu0 0.0
  %74 = vmatpush2.xpose.msra.mxu0 0.0
  %75 = vmatprep.subr.mxu0 0.0
  %76 = vmatpush2.xpose.msra.mxu0 0.0
  %77 = vmatprep.subr.mxu0 0.0
  %78 = vmatpush2.xpose.msra.mxu0 0.0
  %79 = vmatprep.subr.mxu0 0.0
  %80 = vmatpush2.xpose.msra.mxu0 0.0
  %81 = vmatprep.subr.mxu0 0.0
  %82 = vmatpush2.xpose.msra.mxu0 0.0
  %83 = vmatprep.subr.mxu0 0.0
  %84 = vmatpush2.xpose.msra.mxu0 0.0
  %85 = vmatprep.subr.mxu0 0.0
  %86 = vmatpush2.xpose.msra.mxu0 0.0
  %87 = vmatprep.subr.mxu0 0.0
  %88 = vmatpush2.xpose.msra.mxu0 0.0
  %89 = vmatprep.subr.mxu0 0.0
  %90 = vmatpush2.xpose.msra.mxu0 0.0
  %91 = vmatprep.subr.mxu0 0.0
  %92 = vmatpush2.xpose.msra.mxu0 0.0
  %93 = vmatprep.subr.mxu0 0.0
  %94 = vmatpush2.xpose.msra.mxu0 0.0
  %95 = vmatprep.subr.mxu0 0.0
  %96 = vmatpush2.xpose.msra.mxu0 0.0
  %97 = vmatprep.subr.mxu0 0.0
  %98 = vmatpush2.xpose.msra.mxu0 0.0
  %99 = vmatprep.subr.mxu0 0.0
  %100 = vmatpush2.xpose.msra.mxu0 0.0
  %101 = vmatprep.subr.mxu0 0.0
  %102 = vmatpush2.xpose.msra.mxu0 0.0
  %103 = vmatprep.subr.mxu0 0.0
  %104 = vmatpush2.xpose.msra.mxu0 0.0
  %105 = vmatprep.mubr.f32.mxu0 0.0
  %106 = vmatmul.mubr.f32.gmra.mxu0 %v40
  %v107 = vpop.f32.mrf.mxu0
  %v108 = vadd.f32 0.0, %v107
  %v109 = vpop.f32.mrf.mxu0
  %110 = vdwg.mxu0
  %v111 = vld [vmem:[%s1] sm:$0xff]
  %v112 = vld [vmem:[%s1 + $0x8] sm:$0xff]
  %v113 = vld [vmem:[%s1 + $0x10] sm:$0xff]
  %v114 = vld [vmem:[%s1 + $0x18] sm:$0xff]
  %v115 = vld [vmem:[%s1 + $0x20] sm:$0xff]
  %v116 = vld [vmem:[%s1 + $0x28] sm:$0xff]
  %v117 = vld [vmem:[%s1 + $0x30] sm:$0xff]
  %v118 = vld [vmem:[%s1 + $0x38] sm:$0xff]
  %v119 = vld [vmem:[%s1 + $0x40] sm:$0xff]
  %v120 = vld [vmem:[%s1 + $0x48] sm:$0xff]
  %v121 = vld [vmem:[%s1 + $0x50] sm:$0xff]
  %v122 = vld [vmem:[%s1 + $0x58] sm:$0xff]
  %v123 = vld [vmem:[%s1 + $0x60] sm:$0xff]
  %v124 = vld [vmem:[%s1 + $0x68] sm:$0xff]
  %v125 = vld [vmem:[%s1 + $0x70] sm:$0xff]
  %v126 = vld [vmem:[%s1 + $0x78] sm:$0xff]
  %v127 = vlaneseq
  %v128 = vand.u32 %v127, 127
  %vm129 = vcmp.eq.s32.totalorder %v128, 32
  %v130 = vsel %vm129, 1, 0
  %vm131 = vcmp.eq.s32.totalorder %v130, 1
  %v132 = vsel %vm131, %v111, 0.0
  %v133 = vsel %vm131, %v112, 0.0
  %v134 = vsel %vm131, %v113, 0.0
  %v135 = vsel %vm131, %v114, 0.0
  %v136 = vsel %vm131, %v115, 0.0
  %v137 = vsel %vm131, %v116, 0.0
  %v138 = vsel %vm131, %v117, 0.0
  %v139 = vsel %vm131, %v118, 0.0
  %v140 = vsel %vm131, %v119, 0.0
  %v141 = vsel %vm131, %v120, 0.0
  %v142 = vsel %vm131, %v121, 0.0
  %v143 = vsel %vm131, %v122, 0.0
  %v144 = vsel %vm131, %v123, 0.0
  %v145 = vsel %vm131, %v124, 0.0
  %v146 = vsel %vm131, %v125, 0.0
  %v147 = vsel %vm131, %v126, 0.0
  %148 = vadd.xlane.f32.xlu0 %v132
  %v149 = vpop.xlane.xlu0 %148
  %150 = vadd.xlane.f32.xlu0 %v133
  %v151 = vpop.xlane.xlu0 %150
  %152 = vadd.xlane.f32.xlu0 %v134
  %v153 = vpop.xlane.xlu0 %152
  %154 = vadd.xlane.f32.xlu0 %v135
  %v155 = vpop.xlane.xlu0 %154
  %156 = vadd.xlane.f32.xlu0 %v136
  %v157 = vpop.xlane.xlu0 %156
  %158 = vadd.xlane.f32.xlu0 %v137
  %v159 = vpop.xlane.xlu0 %158
  %160 = vadd.xlane.f32.xlu0 %v138
  %v161 = vpop.xlane.xlu0 %160
  %162 = vadd.xlane.f32.xlu0 %v139
  %v163 = vpop.xlane.xlu0 %162
  %164 = vadd.xlane.f32.xlu0 %v140
  %v165 = vpop.xlane.xlu0 %164
  %166 = vadd.xlane.f32.xlu0 %v141
  %v167 = vpop.xlane.xlu0 %166
  %168 = vadd.xlane.f32.xlu0 %v142
  %v169 = vpop.xlane.xlu0 %168
  %170 = vadd.xlane.f32.xlu0 %v143
  %v171 = vpop.xlane.xlu0 %170
  %172 = vadd.xlane.f32.xlu0 %v144
  %v173 = vpop.xlane.xlu0 %172
  %174 = vadd.xlane.f32.xlu0 %v145
  %v175 = vpop.xlane.xlu0 %174
  %176 = vadd.xlane.f32.xlu0 %v146
  %v177 = vpop.xlane.xlu0 %176
  %178 = vadd.xlane.f32.xlu0 %v147
  %v179 = vpop.xlane.xlu0 %178
  %v180 = vlaneseq
  %v181 = vshrl.u32 %v180, 7
  %v182 = vsub.s32 0, %v181
  %v183 = vrot.slane %v108, %v182
  %v184 = vadd.f32 %v149, %v183
  %v185 = vadd.f32 %v151, %v183
  %v186 = vadd.f32 %v153, %v183
  %v187 = vadd.f32 %v155, %v183
  %v188 = vadd.f32 %v157, %v183
  %v189 = vadd.f32 %v159, %v183
  %v190 = vadd.f32 %v161, %v183
  %v191 = vadd.f32 %v163, %v183
  %v192 = vadd.f32 %v165, %v183
  %v193 = vadd.f32 %v167, %v183
  %v194 = vadd.f32 %v169, %v183
  %v195 = vadd.f32 %v171, %v183
  %v196 = vadd.f32 %v173, %v183
  %v197 = vadd.f32 %v175, %v183
  %v198 = vadd.f32 %v177, %v183
  %v199 = vadd.f32 %v179, %v183
  %v200 = vmul.f32 %v184, 0.2
  %v201 = vmul.f32 %v185, 0.2
  %v202 = vmul.f32 %v186, 0.2
  %v203 = vmul.f32 %v187, 0.2
  %v204 = vmul.f32 %v188, 0.2
  %v205 = vmul.f32 %v189, 0.2
  %v206 = vmul.f32 %v190, 0.2
  %v207 = vmul.f32 %v191, 0.2
  %v208 = vmul.f32 %v192, 0.2
  %v209 = vmul.f32 %v193, 0.2
  %v210 = vmul.f32 %v194, 0.2
  %v211 = vmul.f32 %v195, 0.2
  %v212 = vmul.f32 %v196, 0.2
  %v213 = vmul.f32 %v197, 0.2
  %v214 = vmul.f32 %v198, 0.2
  %v215 = vmul.f32 %v199, 0.2
  %v216 = vmax.f32 %v184, %v200
  %v217 = vmax.f32 %v185, %v201
  %v218 = vmax.f32 %v186, %v202
  %v219 = vmax.f32 %v187, %v203
  %v220 = vmax.f32 %v188, %v204
  %v221 = vmax.f32 %v189, %v205
  %v222 = vmax.f32 %v190, %v206
  %v223 = vmax.f32 %v191, %v207
  %v224 = vmax.f32 %v192, %v208
  %v225 = vmax.f32 %v193, %v209
  %v226 = vmax.f32 %v194, %v210
  %v227 = vmax.f32 %v195, %v211
  %v228 = vmax.f32 %v196, %v212
  %v229 = vmax.f32 %v197, %v213
  %v230 = vmax.f32 %v198, %v214
  %v231 = vmax.f32 %v199, %v215
  %v232 = vld [vmem:[%s2] sm:$0xf]
  %v233 = vld [vmem:[%s2 + $0x4] sm:$0xf]
  %v234 = vld [vmem:[%s2 + $0x8] sm:$0xf]
  %v235 = vld [vmem:[%s2 + $0xc] sm:$0xf]
  %v236 = vld [vmem:[%s2 + $0x10] sm:$0xf]
  %v237 = vld [vmem:[%s2 + $0x14] sm:$0xf]
  %v238 = vld [vmem:[%s2 + $0x18] sm:$0xf]
  %v239 = vld [vmem:[%s2 + $0x1c] sm:$0xf]
  %v240 = vld [vmem:[%s2 + $0x20] sm:$0xf]
  %v241 = vld [vmem:[%s2 + $0x24] sm:$0xf]
  %v242 = vld [vmem:[%s2 + $0x28] sm:$0xf]
  %v243 = vld [vmem:[%s2 + $0x2c] sm:$0xf]
  %v244 = vld [vmem:[%s2 + $0x30] sm:$0xf]
  %v245 = vld [vmem:[%s2 + $0x34] sm:$0xf]
  %v246 = vld [vmem:[%s2 + $0x38] sm:$0xf]
  %v247 = vld [vmem:[%s2 + $0x3c] sm:$0xf]
  %v248 = vunpack.c.l.bf16 %v232
  %v249 = vunpack.c.l.bf16 %v233
  %v250 = vunpack.c.l.bf16 %v234
  %v251 = vunpack.c.l.bf16 %v235
  %v252 = vunpack.c.l.bf16 %v236
  %v253 = vunpack.c.l.bf16 %v237
  %v254 = vunpack.c.l.bf16 %v238
  %v255 = vunpack.c.l.bf16 %v239
  %v256 = vunpack.c.l.bf16 %v240
  %v257 = vunpack.c.l.bf16 %v241
  %v258 = vunpack.c.l.bf16 %v242
  %v259 = vunpack.c.l.bf16 %v243
  %v260 = vunpack.c.l.bf16 %v244
  %v261 = vunpack.c.l.bf16 %v245
  %v262 = vunpack.c.l.bf16 %v246
  %v263 = vunpack.c.l.bf16 %v247
  %v264 = vadd.f32 %v216, %v248
  %v265 = vadd.f32 %v217, %v249
  %v266 = vadd.f32 %v218, %v250
  %v267 = vadd.f32 %v219, %v251
  %v268 = vadd.f32 %v220, %v252
  %v269 = vadd.f32 %v221, %v253
  %v270 = vadd.f32 %v222, %v254
  %v271 = vadd.f32 %v223, %v255
  %v272 = vadd.f32 %v224, %v256
  %v273 = vadd.f32 %v225, %v257
  %v274 = vadd.f32 %v226, %v258
  %v275 = vadd.f32 %v227, %v259
  %v276 = vadd.f32 %v228, %v260
  %v277 = vadd.f32 %v229, %v261
  %v278 = vadd.f32 %v230, %v262
  %v279 = vadd.f32 %v231, %v263
  %280 = vmax.xlane.f32.xlu0 %v264
  %v281 = vpop.xlane.xlu0 %280
  %282 = vmax.xlane.f32.xlu0 %v265
  %v283 = vpop.xlane.xlu0 %282
  %284 = vmax.xlane.f32.xlu0 %v266
  %v285 = vpop.xlane.xlu0 %284
  %286 = vmax.xlane.f32.xlu0 %v267
  %v287 = vpop.xlane.xlu0 %286
  %288 = vmax.xlane.f32.xlu0 %v268
  %v289 = vpop.xlane.xlu0 %288
  %290 = vmax.xlane.f32.xlu0 %v269
  %v291 = vpop.xlane.xlu0 %290
  %292 = vmax.xlane.f32.xlu0 %v270
  %v293 = vpop.xlane.xlu0 %292
  %294 = vmax.xlane.f32.xlu0 %v271
  %v295 = vpop.xlane.xlu0 %294
  %296 = vmax.xlane.f32.xlu0 %v272
  %v297 = vpop.xlane.xlu0 %296
  %298 = vmax.xlane.f32.xlu0 %v273
  %v299 = vpop.xlane.xlu0 %298
  %300 = vmax.xlane.f32.xlu0 %v274
  %v301 = vpop.xlane.xlu0 %300
  %302 = vmax.xlane.f32.xlu0 %v275
  %v303 = vpop.xlane.xlu0 %302
  %304 = vmax.xlane.f32.xlu0 %v276
  %v305 = vpop.xlane.xlu0 %304
  %306 = vmax.xlane.f32.xlu0 %v277
  %v307 = vpop.xlane.xlu0 %306
  %308 = vmax.xlane.f32.xlu0 %v278
  %v309 = vpop.xlane.xlu0 %308
  %310 = vmax.xlane.f32.xlu0 %v279
  %v311 = vpop.xlane.xlu0 %310
  %v312 = vsub.f32 %v264, %v281
  %v313 = vsub.f32 %v265, %v283
  %v314 = vsub.f32 %v266, %v285
  %v315 = vsub.f32 %v267, %v287
  %v316 = vsub.f32 %v268, %v289
  %v317 = vsub.f32 %v269, %v291
  %v318 = vsub.f32 %v270, %v293
  %v319 = vsub.f32 %v271, %v295
  %v320 = vsub.f32 %v272, %v297
  %v321 = vsub.f32 %v273, %v299
  %v322 = vsub.f32 %v274, %v301
  %v323 = vsub.f32 %v275, %v303
  %v324 = vsub.f32 %v276, %v305
  %v325 = vsub.f32 %v277, %v307
  %v326 = vsub.f32 %v278, %v309
  %v327 = vsub.f32 %v279, %v311
  %v328 = vmul.f32 %v312, 1.442695
  %v329 = vpow.pop %v328
  %v330 = vmul.f32 %v313, 1.442695
  %v331 = vpow.pop %v330
  %v332 = vmul.f32 %v314, 1.442695
  %v333 = vpow.pop %v332
  %v334 = vmul.f32 %v315, 1.442695
  %v335 = vpow.pop %v334
  %v336 = vmul.f32 %v316, 1.442695
  %v337 = vpow.pop %v336
  %v338 = vmul.f32 %v317, 1.442695
  %v339 = vpow.pop %v338
  %v340 = vmul.f32 %v318, 1.442695
  %v341 = vpow.pop %v340
  %v342 = vmul.f32 %v319, 1.442695
  %v343 = vpow.pop %v342
  %v344 = vmul.f32 %v320, 1.442695
  %v345 = vpow.pop %v344
  %v346 = vmul.f32 %v321, 1.442695
  %v347 = vpow.pop %v346
  %v348 = vmul.f32 %v322, 1.442695
  %v349 = vpow.pop %v348
  %v350 = vmul.f32 %v323, 1.442695
  %v351 = vpow.pop %v350
  %v352 = vmul.f32 %v324, 1.442695
  %v353 = vpow.pop %v352
  %v354 = vmul.f32 %v325, 1.442695
  %v355 = vpow.pop %v354
  %v356 = vmul.f32 %v326, 1.442695
  %v357 = vpow.pop %v356
  %v358 = vmul.f32 %v327, 1.442695
  %v359 = vpow.pop %v358
  %360 = vadd.xlane.f32.xlu0 %v329
  %v361 = vpop.xlane.xlu0 %360
  %362 = vadd.xlane.f32.xlu0 %v331
  %v363 = vpop.xlane.xlu0 %362
  %364 = vadd.xlane.f32.xlu0 %v333
  %v365 = vpop.xlane.xlu0 %364
  %366 = vadd.xlane.f32.xlu0 %v335
  %v367 = vpop.xlane.xlu0 %366
  %368 = vadd.xlane.f32.xlu0 %v337
  %v369 = vpop.xlane.xlu0 %368
  %370 = vadd.xlane.f32.xlu0 %v339
  %v371 = vpop.xlane.xlu0 %370
  %372 = vadd.xlane.f32.xlu0 %v341
  %v373 = vpop.xlane.xlu0 %372
  %374 = vadd.xlane.f32.xlu0 %v343
  %v375 = vpop.xlane.xlu0 %374
  %376 = vadd.xlane.f32.xlu0 %v345
  %v377 = vpop.xlane.xlu0 %376
  %378 = vadd.xlane.f32.xlu0 %v347
  %v379 = vpop.xlane.xlu0 %378
  %380 = vadd.xlane.f32.xlu0 %v349
  %v381 = vpop.xlane.xlu0 %380
  %382 = vadd.xlane.f32.xlu0 %v351
  %v383 = vpop.xlane.xlu0 %382
  %384 = vadd.xlane.f32.xlu0 %v353
  %v385 = vpop.xlane.xlu0 %384
  %386 = vadd.xlane.f32.xlu0 %v355
  %v387 = vpop.xlane.xlu0 %386
  %388 = vadd.xlane.f32.xlu0 %v357
  %v389 = vpop.xlane.xlu0 %388
  %390 = vadd.xlane.f32.xlu0 %v359
  %v391 = vpop.xlane.xlu0 %390
  %v392 = vrcp.pop %v361
  %v393 = vrcp.pop %v363
  %v394 = vrcp.pop %v365
  %v395 = vrcp.pop %v367
  %v396 = vrcp.pop %v369
  %v397 = vrcp.pop %v371
  %v398 = vrcp.pop %v373
  %v399 = vrcp.pop %v375
  %v400 = vrcp.pop %v377
  %v401 = vrcp.pop %v379
  %v402 = vrcp.pop %v381
  %v403 = vrcp.pop %v383
  %v404 = vrcp.pop %v385
  %v405 = vrcp.pop %v387
  %v406 = vrcp.pop %v389
  %v407 = vrcp.pop %v391
  %v408 = vmul.f32 %v329, %v392
  %v409 = vmul.f32 %v331, %v393
  %v410 = vmul.f32 %v333, %v394
  %v411 = vmul.f32 %v335, %v395
  %v412 = vmul.f32 %v337, %v396
  %v413 = vmul.f32 %v339, %v397
  %v414 = vmul.f32 %v341, %v398
  %v415 = vmul.f32 %v343, %v399
  %v416 = vmul.f32 %v345, %v400
  %v417 = vmul.f32 %v347, %v401
  %v418 = vmul.f32 %v349, %v402
  %v419 = vmul.f32 %v351, %v403
  %v420 = vmul.f32 %v353, %v404
  %v421 = vmul.f32 %v355, %v405
  %v422 = vmul.f32 %v357, %v406
  %v423 = vmul.f32 %v359, %v407
  %v424 = vpack.c.bf16 %v409, %v408
  %v425 = vpack.c.bf16 %v411, %v410
  %v426 = vpack.c.bf16 %v413, %v412
  %v427 = vpack.c.bf16 %v415, %v414
  %v428 = vpack.c.bf16 %v417, %v416
  %v429 = vpack.c.bf16 %v419, %v418
  %v430 = vpack.c.bf16 %v421, %v420
  %v431 = vpack.c.bf16 %v423, %v422
  %v432 = vpack.c.bf16 %v25, %v24
  %v433 = vpack.c.bf16 %v27, %v26
  %v434 = vpack.c.bf16 %v29, %v28
  %v435 = vpack.c.bf16 %v31, %v30
  %v436 = vpack.c.bf16 %v33, %v32
  %v437 = vpack.c.bf16 %v35, %v34
  %v438 = vpack.c.bf16 %v37, %v36
  %v439 = vpack.c.bf16 %v39, %v38
  %440 = vmatprep.subr.bf16.mxu0 0
  %441 = vmatpush1.bf16.msra.mxu0 %v439
  %442 = vmatprep.subr.bf16.mxu0 0
  %443 = vmatpush1.bf16.msra.mxu0 %v438
  %444 = vmatprep.subr.bf16.mxu0 0
  %445 = vmatpush1.bf16.msra.mxu0 %v437
  %446 = vmatprep.subr.bf16.mxu0 0
  %447 = vmatpush1.bf16.msra.mxu0 %v436
  %448 = vmatprep.subr.bf16.mxu0 0
  %449 = vmatpush1.bf16.msra.mxu0 %v435
  %450 = vmatprep.subr.bf16.mxu0 0
  %451 = vmatpush1.bf16.msra.mxu0 %v434
  %452 = vmatprep.subr.bf16.mxu0 0
  %453 = vmatpush1.bf16.msra.mxu0 %v433
  %454 = vmatprep.subr.bf16.mxu0 0
  %455 = vmatpush1.bf16.msra.mxu0 %v432
  %456 = vmatprep.subr.bf16.mxu0 0
  %457 = vmatpush2.bf16.msra.mxu0 0
  %458 = vmatprep.subr.bf16.mxu0 0
  %459 = vmatpush2.bf16.msra.mxu0 0
  %460 = vmatprep.subr.bf16.mxu0 0
  %461 = vmatpush2.bf16.msra.mxu0 0
  %462 = vmatprep.subr.bf16.mxu0 0
  %463 = vmatpush2.bf16.msra.mxu0 0
  %464 = vmatprep.subr.bf16.mxu0 0
  %465 = vmatpush2.bf16.msra.mxu0 0
  %466 = vmatprep.subr.bf16.mxu0 0
  %467 = vmatpush2.bf16.msra.mxu0 0
  %468 = vmatprep.subr.bf16.mxu0 0
  %469 = vmatpush2.bf16.msra.mxu0 0
  %470 = vmatprep.subr.bf16.mxu0 0
  %471 = vmatpush2.bf16.msra.mxu0 0
  %472 = vmatprep.mubr.bf16.mxu0 0
  %473 = vmatmul.mubr.bf16.gmra.mxu0 %v424
  %v474 = vpop.f32.mrf.mxu0
  %v475 = vadd.f32 0.0, %v474
  %v476 = vpop.f32.mrf.mxu0
  %v477 = vpop.f32.mrf.mxu0
  %v478 = vadd.f32 0.0, %v477
  %v479 = vpop.f32.mrf.mxu0
  %480 = vmatprep.mubr.bf16.mxu0 0
  %481 = vmatmul.mubr.bf16.gmra.mxu0 %v425
  %v482 = vpop.f32.mrf.mxu0
  %v483 = vadd.f32 0.0, %v482
  %v484 = vpop.f32.mrf.mxu0
  %v485 = vpop.f32.mrf.mxu0
  %v486 = vadd.f32 0.0, %v485
  %v487 = vpop.f32.mrf.mxu0
  %488 = vmatprep.mubr.bf16.mxu0 0
  %489 = vmatmul.mubr.bf16.gmra.mxu0 %v426
  %v490 = vpop.f32.mrf.mxu0
  %v491 = vadd.f32 0.0, %v490
  %v492 = vpop.f32.mrf.mxu0
  %v493 = vpop.f32.mrf.mxu0
  %v494 = vadd.f32 0.0, %v493
  %v495 = vpop.f32.mrf.mxu0
  %496 = vmatprep.mubr.bf16.mxu0 0
  %497 = vmatmul.mubr.bf16.gmra.mxu0 %v427
  %v498 = vpop.f32.mrf.mxu0
  %v499 = vadd.f32 0.0, %v498
  %v500 = vpop.f32.mrf.mxu0
  %v501 = vpop.f32.mrf.mxu0
  %v502 = vadd.f32 0.0, %v501
  %v503 = vpop.f32.mrf.mxu0
  %504 = vmatprep.mubr.bf16.mxu0 0
  %505 = vmatmul.mubr.bf16.gmra.mxu0 %v428
  %v506 = vpop.f32.mrf.mxu0
  %v507 = vadd.f32 0.0, %v506
  %v508 = vpop.f32.mrf.mxu0
  %v509 = vpop.f32.mrf.mxu0
  %v510 = vadd.f32 0.0, %v509
  %v511 = vpop.f32.mrf.mxu0
  %512 = vmatprep.mubr.bf16.mxu0 0
  %513 = vmatmul.mubr.bf16.gmra.mxu0 %v429
  %v514 = vpop.f32.mrf.mxu0
  %v515 = vadd.f32 0.0, %v514
  %v516 = vpop.f32.mrf.mxu0
  %v517 = vpop.f32.mrf.mxu0
  %v518 = vadd.f32 0.0, %v517
  %v519 = vpop.f32.mrf.mxu0
  %520 = vmatprep.mubr.bf16.mxu0 0
  %521 = vmatmul.mubr.bf16.gmra.mxu0 %v430
  %v522 = vpop.f32.mrf.mxu0
  %v523 = vadd.f32 0.0, %v522
  %v524 = vpop.f32.mrf.mxu0
  %v525 = vpop.f32.mrf.mxu0
  %v526 = vadd.f32 0.0, %v525
  %v527 = vpop.f32.mrf.mxu0
  %528 = vmatprep.mubr.bf16.mxu0 0
  %529 = vmatmul.mubr.bf16.gmra.mxu0 %v431
  %v530 = vpop.f32.mrf.mxu0
  %v531 = vadd.f32 0.0, %v530
  %v532 = vpop.f32.mrf.mxu0
  %v533 = vpop.f32.mrf.mxu0
  %v534 = vadd.f32 0.0, %v533
  %v535 = vpop.f32.mrf.mxu0
  %536 = vdwg.mxu0
  %v537 = vld [vmem:[%s4] sm:$0x1]
  %v539 = vlaneseq
  %v540 = vshrl.u32 %v539, 7
  %v541 = vsub.s32 0, %v540
  %v542 = vrot.slane %v537, %v541
  %v544 = vmul.f32 %v475, %v542
  %v545 = vmul.f32 %v478, %v542
  %v546 = vmul.f32 %v483, %v542
  %v547 = vmul.f32 %v486, %v542
  %v548 = vmul.f32 %v491, %v542
  %v549 = vmul.f32 %v494, %v542
  %v550 = vmul.f32 %v499, %v542
  %v551 = vmul.f32 %v502, %v542
  %v552 = vmul.f32 %v507, %v542
  %v553 = vmul.f32 %v510, %v542
  %v554 = vmul.f32 %v515, %v542
  %v555 = vmul.f32 %v518, %v542
  %v556 = vmul.f32 %v523, %v542
  %v557 = vmul.f32 %v526, %v542
  %v558 = vmul.f32 %v531, %v542
  %v559 = vmul.f32 %v534, %v542
  %v560 = vld [vmem:[%s5] sm:$0x1]
  %v562 = vlaneseq
  %v563 = vshrl.u32 %v562, 7
  %v564 = vsub.s32 0, %v563
  %v565 = vrot.slane %v560, %v564
  %v567 = vadd.f32 %v544, %v565
  %v568 = vadd.f32 %v545, %v565
  %v569 = vadd.f32 %v546, %v565
  %v570 = vadd.f32 %v547, %v565
  %v571 = vadd.f32 %v548, %v565
  %v572 = vadd.f32 %v549, %v565
  %v573 = vadd.f32 %v550, %v565
  %v574 = vadd.f32 %v551, %v565
  %v575 = vadd.f32 %v552, %v565
  %v576 = vadd.f32 %v553, %v565
  %v577 = vadd.f32 %v554, %v565
  %v578 = vadd.f32 %v555, %v565
  %v579 = vadd.f32 %v556, %v565
  %v580 = vadd.f32 %v557, %v565
  %v581 = vadd.f32 %v558, %v565
  %v582 = vadd.f32 %v559, %v565
  %v583 = vmax.f32 %v567, 0.0
  %v584 = vmax.f32 %v568, 0.0
  %v585 = vmax.f32 %v569, 0.0
  %v586 = vmax.f32 %v570, 0.0
  %v587 = vmax.f32 %v571, 0.0
  %v588 = vmax.f32 %v572, 0.0
  %v589 = vmax.f32 %v573, 0.0
  %v590 = vmax.f32 %v574, 0.0
  %v591 = vmax.f32 %v575, 0.0
  %v592 = vmax.f32 %v576, 0.0
  %v593 = vmax.f32 %v577, 0.0
  %v594 = vmax.f32 %v578, 0.0
  %v595 = vmax.f32 %v579, 0.0
  %v596 = vmax.f32 %v580, 0.0
  %v597 = vmax.f32 %v581, 0.0
  %v598 = vmax.f32 %v582, 0.0
  %599 = vst [vmem:[%s6] sm:$0xff] %v583
  %600 = vst [vmem:[%s6 + $0x8] sm:$0xff] %v584
  %601 = vst [vmem:[%s6 + $0x10] sm:$0xff] %v585
  %602 = vst [vmem:[%s6 + $0x18] sm:$0xff] %v586
  %603 = vst [vmem:[%s6 + $0x20] sm:$0xff] %v587
  %604 = vst [vmem:[%s6 + $0x28] sm:$0xff] %v588
  %605 = vst [vmem:[%s6 + $0x30] sm:$0xff] %v589
  %606 = vst [vmem:[%s6 + $0x38] sm:$0xff] %v590
  %607 = vst [vmem:[%s6 + $0x40] sm:$0xff] %v591
  %608 = vst [vmem:[%s6 + $0x48] sm:$0xff] %v592
  %609 = vst [vmem:[%s6 + $0x50] sm:$0xff] %v593
  %610 = vst [vmem:[%s6 + $0x58] sm:$0xff] %v594
  %611 = vst [vmem:[%s6 + $0x60] sm:$0xff] %v595
  %612 = vst [vmem:[%s6 + $0x68] sm:$0xff] %v596
  %613 = vst [vmem:[%s6 + $0x70] sm:$0xff] %v597
  %614 = vst [vmem:[%s6 + $0x78] sm:$0xff] %v598
  // Predicated region
  $region26: #{gat_forward.6} parent=0 // pred_check
    _
  $region27: #{gat_forward.6} parent=0 // pred_check_branch
    %616 = sbr.rel (0) target = $region29
  $region28: #{gat_forward.6} parent=0 // pred_region
    _
  $region29: #{gat_forward.6} parent=0 // pred_fallthru
    _
  // Predicated region
  $region30: #{gat_forward.6} parent=0 // pred_check
    _
  $region31: #{gat_forward.6} parent=0 // pred_check_branch
    %618 = sbr.rel (0) target = $region33
  $region32: #{gat_forward.6} parent=0 // pred_region
    _
  $region33: #{gat_forward.6} parent=0 // pred_fallthru
    _

</llo_original>
